<compile_context>
chip_gen: v7x
topology: tpu7x:2x2x1
jax: 0.10.0
libtpu: 0.0.40
codegen_flags: <defaults>
</compile_context>

<pallas_src>
from functools import partial

import jax
import jax.numpy as jnp
from jax.experimental import pallas as pl
from jax.experimental.pallas import tpu as pltpu

LANE = 128
BATCH_ALIGN = 16   # bf16 sublane packing: keep batch tiles 16-row aligned


def _round_up(x, m):
    return ((x + m - 1) // m) * m


def _pad2d(a, rows, cols):
    r, c = a.shape
    return jnp.pad(a, ((0, rows - r), (0, cols - c)))


# ----------------------------------------------------------------------------
# Fused kernel (built per architecture; traced once)
# ----------------------------------------------------------------------------
def _make_fused_vae_kernel(n_enc, n_dec, latent_dim, compute_dtype):
    def kernel(*refs):
        it = iter(refs)
        x_ref = next(it)
        enc = [(next(it), next(it)) for _ in range(n_enc)]
        wh_ref, bh_ref = next(it), next(it)          # fused mean||logvar head
        eps_ref = next(it)
        dec = [(next(it), next(it)) for _ in range(n_dec)]
        wo_ref, bo_ref = next(it), next(it)
        out_ref, heads_ref = next(it), next(it)

        def linear(h, w_ref, b_ref, relu):
            # bf16 MXU operands, fp32 accumulation + fp32 epilogue.
            # TODO(synk): on v5e (no bf16 VPU) fold this cast into the previous
            # layer's ReLU epilogue if a bundle dump shows VALU saturation.
            acc = jnp.dot(h.astype(compute_dtype), w_ref[...],
                          preferred_element_type=jnp.float32)
            acc = acc + b_ref[...]                   # (1, Dout) fp32 broadcast
            if relu:
                acc = jnp.maximum(acc, 0.0)
            return acc

        # ---- encoder trunk ----
        h = x_ref[...]                               # already compute dtype
        for w, b in enc:
            h = linear(h, w, b, relu=True)

        # ---- fused mean / logvar head + reparameterize ----
        heads = linear(h, wh_ref, bh_ref, relu=False)   # (tb, 2*latent) fp32
        mean = heads[:, :latent_dim]
        log_var = heads[:, latent_dim:]
        # TODO(synk): eps could be drawn on-chip (pltpu.prng_seed +
        # pltpu.stateful_normal) to drop this input stream entirely; it is
        # kept as an input for deterministic testing against the reference.
        z = mean + jnp.exp(0.5 * log_var) * eps_ref[...].astype(jnp.float32)

        # ---- decoder ----
        h = z
        for w, b in dec:
            h = linear(h, w, b, relu=True)
        out = linear(h, wo_ref, bo_ref, relu=False)

        out_ref[...] = out.astype(out_ref.dtype)
        heads_ref[...] = heads.astype(heads_ref.dtype)

    return kernel


# ----------------------------------------------------------------------------
# Parameter construction (PyTorch-style uniform(-1/sqrt(fan_in)) init, fp32)
# ----------------------------------------------------------------------------
def _init_linear(key, din, dout, dtype=jnp.float32):
    kw, kb = jax.random.split(key)
    bound = 1.0 / jnp.sqrt(jnp.asarray(din, dtype))
    w = jax.random.uniform(kw, (din, dout), dtype, -bound, bound)
    b = jax.random.uniform(kb, (dout,), dtype, -bound, bound)
    return w, b


def make_vae_params(key, in_dim, e_hidden_dim, latent_dim, d_hidden_dim,
                    out_dim, e_hidden_layers, d_hidden_layers):
    n_keys = (1 + e_hidden_layers) + 2 + (1 + d_hidden_layers) + 1
    keys = iter(jax.random.split(key, n_keys))
    params = {"enc_layers": [], "dec_layers": []}

    dims = [in_dim] + [e_hidden_dim] * (1 + e_hidden_layers)
    for din, dout in zip(dims[:-1], dims[1:]):
        params["enc_layers"].append(_init_linear(next(keys), din, dout))
    params["enc_mean"] = _init_linear(next(keys), e_hidden_dim, latent_dim)
    params["enc_logvar"] = _init_linear(next(keys), e_hidden_dim, latent_dim)

    dims = [latent_dim] + [d_hidden_dim] * (1 + d_hidden_layers)
    for din, dout in zip(dims[:-1], dims[1:]):
        params["dec_layers"].append(_init_linear(next(keys), din, dout))
    params["dec_out"] = _init_linear(next(keys), d_hidden_dim, out_dim)
    return params


def prepare_kernel_params(params, compute_dtype=jnp.bfloat16):
    """Cast weights to the MXU compute dtype; zero-pad ONLY the hidden
    matmul-output (N) dims to 128 lanes.  K dims fed by external inputs
    (in_dim, latent_dim) and the final out_dim keep their true widths."""
    in_dim = params["enc_layers"][0][0].shape[0]
    latent_dim = params["enc_mean"][0].shape[1]
    out_dim = params["dec_out"][0].shape[1]

    def pad_layer(w, b, k_pad, n_pad):
        w_p = _pad2d(w, k_pad, n_pad).astype(compute_dtype)
        b_p = _pad2d(b.reshape(1, -1), 1, n_pad).astype(jnp.float32)
        return w_p, b_p

    enc, cur = [], in_dim
    for w, b in params["enc_layers"]:
        n_pad = _round_up(w.shape[1], LANE)
        enc.append(pad_layer(w, b, cur, n_pad))
        cur = n_pad

    wm, bm = params["enc_mean"]
    wv, bv = params["enc_logvar"]
    wh = jnp.concatenate([_pad2d(wm, cur, latent_dim),
                          _pad2d(wv, cur, latent_dim)],
                         axis=1).astype(compute_dtype)
    bh = jnp.concatenate([bm, bv]).reshape(1, -1).astype(jnp.float32)

    dec, cur = [], latent_dim
    for w, b in params["dec_layers"]:
        n_pad = _round_up(w.shape[1], LANE)
        dec.append(pad_layer(w, b, cur, n_pad))
        cur = n_pad
    dec_out = pad_layer(*params["dec_out"], cur, out_dim)

    karrays = {"enc_layers": enc, "enc_heads": (wh, bh),
               "dec_layers": dec, "dec_out": dec_out}
    meta = {"in_dim": in_dim, "latent_dim": latent_dim, "out_dim": out_dim,
            "compute_dtype": compute_dtype}
    return karrays, meta


# ----------------------------------------------------------------------------
# Fused forward (single pallas_call)
# ----------------------------------------------------------------------------
def vae_forward_pallas(kparams, x, eps, *, meta, weight_buffer_count=1):
    B = x.shape[0]
    in_dim, latent_dim, out_dim = meta["in_dim"], meta["latent_dim"], meta["out_dim"]
    cdt = meta["compute_dtype"]
    c_bytes = jnp.dtype(cdt).itemsize

    # Batch tiling: >= 2 grid steps whenever B allows it (v7x megacore split),
    # 512-row tiles for very large batches (better HBM pipelining, v6e/v5e).
    if B >= 1024:
        tb = 512
    elif B > BATCH_ALIGN:
        tb = min(256, _round_up(pl.cdiv(B, 2), BATCH_ALIGN))
    else:
        tb = BATCH_ALIGN
    b_p = _round_up(B, tb)
    grid = (b_p // tb,)

    # Only the batch dim is padded; x / eps stream in the bf16 compute dtype.
    x_p = _pad2d(x, b_p, in_dim).astype(cdt)
    eps_p = _pad2d(eps, b_p, latent_dim).astype(cdt)

    enc, dec = kparams["enc_layers"], kparams["dec_layers"]
    wh, bh = kparams["enc_heads"]
    wo, bo = kparams["dec_out"]

    # Resident weights: constant index_map => fetched once and reused every
    # grid step; Buffered(1) removes the pointless double buffer.
    wspec_kwargs = ({} if weight_buffer_count is None
                    else {"pipeline_mode": pl.Buffered(weight_buffer_count)})

    inputs = [x_p]
    in_specs = [pl.BlockSpec((tb, in_dim), lambda i: (i, 0))]

    def add_weight(w, b):
        # TODO(synk): for bf16 hidden dims >= ~2048 the resident-weight design
        # overflows v7x's 64 MiB VMEM; add a K/N grid axis ("arbitrary") with
        # an fp32 accumulator, or stream weight tiles via pltpu.emit_pipeline.
        inputs.extend([w, b])
        din, dout = w.shape
        in_specs.append(pl.BlockSpec((din, dout), lambda i: (0, 0), **wspec_kwargs))
        in_specs.append(pl.BlockSpec((1, dout), lambda i: (0, 0), **wspec_kwargs))

    for w, b in enc:
        add_weight(w, b)
    add_weight(wh, bh)
    inputs.append(eps_p)
    in_specs.append(pl.BlockSpec((tb, latent_dim), lambda i: (i, 0)))
    for w, b in dec:
        add_weight(w, b)
    add_weight(wo, bo)

    out_shape = (jax.ShapeDtypeStruct((b_p, out_dim), jnp.float32),
                 jax.ShapeDtypeStruct((b_p, 2 * latent_dim), jnp.float32))
    out_specs = (pl.BlockSpec((tb, out_dim), lambda i: (i, 0)),
                 pl.BlockSpec((tb, 2 * latent_dim), lambda i: (i, 0)))

    # VMEM budget: resident weights (x buffer count) + double-buffered streams
    # + a few fp32 activation temporaries, with headroom.
    all_layers = list(enc) + [(wh, bh)] + list(dec) + [(wo, bo)]
    wbuf = weight_buffer_count or 2
    weight_bytes = sum(a.size * a.dtype.itemsize
                       for w, b in all_layers for a in (w, b)) * wbuf
    stream_bytes = 2 * tb * (in_dim * c_bytes + latent_dim * c_bytes
                             + out_dim * 4 + 2 * latent_dim * 4)
    max_width = max(w.shape[1] for w, _ in all_layers)
    act_bytes = 4 * tb * max_width * 4
    vmem_limit = int(min((weight_bytes + stream_bytes + act_bytes) * 5 // 4
                         + (4 << 20), 128 << 20))

    flops = sum(2 * b_p * w.shape[0] * w.shape[1] for w, _ in all_layers)
    bytes_accessed = (sum(a.size * a.dtype.itemsize for a in inputs)
                      + b_p * (out_dim + 2 * latent_dim) * 4)

    kernel = _make_fused_vae_kernel(len(enc), len(dec), latent_dim, cdt)

    out_pad, heads_pad = pl.pallas_call(
        kernel,
        out_shape=out_shape,
        grid=grid,
        in_specs=in_specs,
        out_specs=out_specs,
        compiler_params=pltpu.CompilerParams(
            dimension_semantics=("parallel",),
            vmem_limit_bytes=vmem_limit),
        cost_estimate=pl.CostEstimate(flops=flops,
                                      transcendentals=b_p * latent_dim,
                                      bytes_accessed=bytes_accessed),
    )(*inputs)

    # TODO(synk): `idx` argument of VAE.forward is unused by the MLP encoder
    # path, so it is omitted here.
    return (out_pad[:B],
            heads_pad[:B, :latent_dim],
            heads_pad[:B, latent_dim:])


# ----------------------------------------------------------------------------
# Reference (pure JAX) for correctness check
# ----------------------------------------------------------------------------
def vae_forward_ref(params, x, eps, matmul_dtype=None):
    """Pure-JAX reference.  matmul_dtype=jnp.bfloat16 mirrors the kernel's
    MXU operand precision (fp32 accumulation) for a tight numerical check."""
    def mm(a, w):
        if matmul_dtype is not None:
            a, w = a.astype(matmul_dtype), w.astype(matmul_dtype)
        return jnp.dot(a, w, preferred_element_type=jnp.float32)

    h = x
    for w, b in params["enc_layers"]:
        h = jnp.maximum(mm(h, w) + b, 0.0)
    mean = mm(h, params["enc_mean"][0]) + params["enc_mean"][1]
    log_var = mm(h, params["enc_logvar"][0]) + params["enc_logvar"][1]
    z = mean + jnp.exp(0.5 * log_var) * eps
    h = z
    for w, b in params["dec_layers"]:
        h = jnp.maximum(mm(h, w) + b, 0.0)
    out = mm(h, params["dec_out"][0]) + params["dec_out"][1]
    return out, mean, log_var


if __name__ == "__main__":
    key = jax.random.PRNGKey(0)
    k_param, k_x, k_eps = jax.random.split(key, 3)

    batch = 8
    in_dim, e_hidden_dim, latent_dim = 32, 32, 16
    d_hidden_dim, out_dim = 32, 32
    e_hidden_layers = d_hidden_layers = 1

    params = make_vae_params(k_param, in_dim, e_hidden_dim, latent_dim,
                             d_hidden_dim, out_dim,
                             e_hidden_layers, d_hidden_layers)
    kparams, meta = prepare_kernel_params(params, compute_dtype=jnp.bfloat16)

    x = jax.random.normal(k_x, (batch, in_dim), jnp.float32)
    eps = jax.random.normal(k_eps, (batch, latent_dim), jnp.float32)

    def run(buffer_count):
        fwd = jax.jit(partial(vae_forward_pallas, meta=meta,
                              weight_buffer_count=buffer_count))
        return jax.block_until_ready(fwd(kparams, x, eps))

    try:
        out, mean, log_var = run(1)      # single-buffered resident weights
    except Exception:
        # Fallback for jax builds without BlockSpec(pipeline_mode=...).
        out, mean, log_var = run(None)

    assert out.shape == (batch, out_dim)
    assert mean.shape == (batch, latent_dim)
    assert log_var.shape == (batch, latent_dim)

    # Tight check vs a reference that mirrors the kernel's bf16 MXU operands.
    eps_bf = eps.astype(jnp.bfloat16).astype(jnp.float32)
    out_b, mean_b, lv_b = vae_forward_ref(params, x, eps_bf,
                                          matmul_dtype=jnp.bfloat16)
    assert jnp.allclose(out, out_b, atol=2e-2, rtol=2e-2)
    assert jnp.allclose(mean, mean_b, atol=2e-2, rtol=2e-2)
    assert jnp.allclose(log_var, lv_b, atol=2e-2, rtol=2e-2)

    # Loose check vs fp32 module semantics (bf16 operands -> ~1e-1 drift).
    out_f, mean_f, lv_f = vae_forward_ref(params, x, eps)
    assert jnp.allclose(out, out_f, atol=1.5e-1, rtol=1.5e-1)
    assert jnp.allclose(mean, mean_f, atol=1e-1, rtol=1e-1)
    assert jnp.allclose(log_var, lv_f, atol=1e-1, rtol=1e-1)

    print("KERNEL_OK")
</pallas_src>

<mosaic_0001>
module attributes {stable_mosaic.version = 11 : i64} {
  func.func @kernel(%arg0: i32, %arg1: memref<16x32xbf16, #tpu.memory_space<vmem>>, %arg2: memref<32x128xbf16, #tpu.memory_space<vmem>>, %arg3: memref<1x128xf32, #tpu.memory_space<vmem>>, %arg4: memref<128x128xbf16, #tpu.memory_space<vmem>>, %arg5: memref<1x128xf32, #tpu.memory_space<vmem>>, %arg6: memref<128x32xbf16, #tpu.memory_space<vmem>>, %arg7: memref<1x32xf32, #tpu.memory_space<vmem>>, %arg8: memref<16x16xbf16, #tpu.memory_space<vmem>>, %arg9: memref<16x128xbf16, #tpu.memory_space<vmem>>, %arg10: memref<1x128xf32, #tpu.memory_space<vmem>>, %arg11: memref<128x128xbf16, #tpu.memory_space<vmem>>, %arg12: memref<1x128xf32, #tpu.memory_space<vmem>>, %arg13: memref<128x32xbf16, #tpu.memory_space<vmem>>, %arg14: memref<1x32xf32, #tpu.memory_space<vmem>>, %arg15: memref<16x32xf32, #tpu.memory_space<vmem>>, %arg16: memref<16x32xf32, #tpu.memory_space<vmem>>) attributes {dimension_semantics = [#tpu.dimension_semantics<parallel>], iteration_bounds = array<i64: 1>, scalar_prefetch = 0 : i64, scratch_operands = 0 : i64, tpu.core_type = #tpu.core_type<tc>, window_params = [{transform_indices = @transform_0, window_bounds = array<i64: 16, 32>}, {pipeline_mode = #tpu.pipeline_mode<synchronous>, transform_indices = @transform_1, window_bounds = array<i64: 32, 128>}, {pipeline_mode = #tpu.pipeline_mode<synchronous>, transform_indices = @transform_2, window_bounds = array<i64: 1, 128>}, {pipeline_mode = #tpu.pipeline_mode<synchronous>, transform_indices = @transform_3, window_bounds = array<i64: 128, 128>}, {pipeline_mode = #tpu.pipeline_mode<synchronous>, transform_indices = @transform_4, window_bounds = array<i64: 1, 128>}, {pipeline_mode = #tpu.pipeline_mode<synchronous>, transform_indices = @transform_5, window_bounds = array<i64: 128, 32>}, {pipeline_mode = #tpu.pipeline_mode<synchronous>, transform_indices = @transform_6, window_bounds = array<i64: 1, 32>}, {transform_indices = @transform_7, window_bounds = array<i64: 16, 16>}, {pipeline_mode = #tpu.pipeline_mode<synchronous>, transform_indices = @transform_8, window_bounds = array<i64: 16, 128>}, {pipeline_mode = #tpu.pipeline_mode<synchronous>, transform_indices = @transform_9, window_bounds = array<i64: 1, 128>}, {pipeline_mode = #tpu.pipeline_mode<synchronous>, transform_indices = @transform_10, window_bounds = array<i64: 128, 128>}, {pipeline_mode = #tpu.pipeline_mode<synchronous>, transform_indices = @transform_11, window_bounds = array<i64: 1, 128>}, {pipeline_mode = #tpu.pipeline_mode<synchronous>, transform_indices = @transform_12, window_bounds = array<i64: 128, 32>}, {pipeline_mode = #tpu.pipeline_mode<synchronous>, transform_indices = @transform_13, window_bounds = array<i64: 1, 32>}, {transform_indices = @transform_14, window_bounds = array<i64: 16, 32>}, {transform_indices = @transform_15, window_bounds = array<i64: 16, 32>}]} {
    %c0 = arith.constant 0 : index
    %c0_0 = arith.constant 0 : index
    %0 = vector.load %arg1[%c0, %c0_0] : memref<16x32xbf16, #tpu.memory_space<vmem>>, vector<16x32xbf16>
    %c0_1 = arith.constant 0 : index
    %c0_2 = arith.constant 0 : index
    %1 = vector.load %arg2[%c0_1, %c0_2] : memref<32x128xbf16, #tpu.memory_space<vmem>>, vector<32x128xbf16>
    %cst = arith.constant dense<0.000000e+00> : vector<16x128xf32>
    %2 = tpu.matmul %0, %1, %cst {dimension_numbers = #tpu.dot_dimension_numbers<[1], [0], [0], [1], [0, 0, 1, 1], [], []>} : vector<16x32xbf16>, vector<32x128xbf16>, vector<16x128xf32> -> vector<16x128xf32>
    %c0_3 = arith.constant 0 : index
    %c0_4 = arith.constant 0 : index
    %3 = vector.load %arg3[%c0_3, %c0_4] : memref<1x128xf32, #tpu.memory_space<vmem>>, vector<1x128xf32>
    %4 = vector.broadcast %3 : vector<1x128xf32> to vector<16x128xf32>
    %5 = arith.addf %2, %4 : vector<16x128xf32>
    %cst_5 = arith.constant 0.000000e+00 : f32
    %6 = vector.broadcast %cst_5 : f32 to vector<16x128xf32>
    %7 = arith.maximumf %5, %6 : vector<16x128xf32>
    %8 = arith.truncf %7 : vector<16x128xf32> to vector<16x128xbf16>
    %c0_6 = arith.constant 0 : index
    %c0_7 = arith.constant 0 : index
    %9 = vector.load %arg4[%c0_6, %c0_7] : memref<128x128xbf16, #tpu.memory_space<vmem>>, vector<128x128xbf16>
    %cst_8 = arith.constant dense<0.000000e+00> : vector<16x128xf32>
    %10 = tpu.matmul %8, %9, %cst_8 {dimension_numbers = #tpu.dot_dimension_numbers<[1], [0], [0], [1], [0, 0, 1, 1], [], []>} : vector<16x128xbf16>, vector<128x128xbf16>, vector<16x128xf32> -> vector<16x128xf32>
    %c0_9 = arith.constant 0 : index
    %c0_10 = arith.constant 0 : index
    %11 = vector.load %arg5[%c0_9, %c0_10] : memref<1x128xf32, #tpu.memory_space<vmem>>, vector<1x128xf32>
    %12 = vector.broadcast %11 : vector<1x128xf32> to vector<16x128xf32>
    %13 = arith.addf %10, %12 : vector<16x128xf32>
    %cst_11 = arith.constant 0.000000e+00 : f32
    %14 = vector.broadcast %cst_11 : f32 to vector<16x128xf32>
    %15 = arith.maximumf %13, %14 : vector<16x128xf32>
    %16 = arith.truncf %15 : vector<16x128xf32> to vector<16x128xbf16>
    %c0_12 = arith.constant 0 : index
    %c0_13 = arith.constant 0 : index
    %17 = vector.load %arg6[%c0_12, %c0_13] : memref<128x32xbf16, #tpu.memory_space<vmem>>, vector<128x32xbf16>
    %cst_14 = arith.constant dense<0.000000e+00> : vector<16x32xf32>
    %18 = tpu.matmul %16, %17, %cst_14 {dimension_numbers = #tpu.dot_dimension_numbers<[1], [0], [0], [1], [0, 0, 1, 1], [], []>} : vector<16x128xbf16>, vector<128x32xbf16>, vector<16x32xf32> -> vector<16x32xf32>
    %c0_15 = arith.constant 0 : index
    %c0_16 = arith.constant 0 : index
    %19 = vector.load %arg7[%c0_15, %c0_16] : memref<1x32xf32, #tpu.memory_space<vmem>>, vector<1x32xf32>
    %20 = vector.broadcast %19 : vector<1x32xf32> to vector<16x32xf32>
    %21 = arith.addf %18, %20 : vector<16x32xf32>
    %22 = vector.extract_strided_slice %21 {offsets = [0, 0], sizes = [16, 16], strides = [1, 1]} : vector<16x32xf32> to vector<16x16xf32>
    %23 = vector.extract_strided_slice %21 {offsets = [0, 16], sizes = [16, 16], strides = [1, 1]} : vector<16x32xf32> to vector<16x16xf32>
    %cst_17 = arith.constant 5.000000e-01 : f32
    %24 = vector.broadcast %cst_17 : f32 to vector<16x16xf32>
    %25 = arith.mulf %24, %23 : vector<16x16xf32>
    %26 = math.exp %25 : vector<16x16xf32>
    %c0_18 = arith.constant 0 : index
    %c0_19 = arith.constant 0 : index
    %27 = vector.load %arg8[%c0_18, %c0_19] : memref<16x16xbf16, #tpu.memory_space<vmem>>, vector<16x16xbf16>
    %28 = arith.extf %27 : vector<16x16xbf16> to vector<16x16xf32>
    %29 = arith.mulf %26, %28 : vector<16x16xf32>
    %30 = arith.addf %22, %29 : vector<16x16xf32>
    %31 = arith.truncf %30 : vector<16x16xf32> to vector<16x16xbf16>
    %c0_20 = arith.constant 0 : index
    %c0_21 = arith.constant 0 : index
    %32 = vector.load %arg9[%c0_20, %c0_21] : memref<16x128xbf16, #tpu.memory_space<vmem>>, vector<16x128xbf16>
    %cst_22 = arith.constant dense<0.000000e+00> : vector<16x128xf32>
    %33 = tpu.matmul %31, %32, %cst_22 {dimension_numbers = #tpu.dot_dimension_numbers<[1], [0], [0], [1], [0, 0, 1, 1], [], []>} : vector<16x16xbf16>, vector<16x128xbf16>, vector<16x128xf32> -> vector<16x128xf32>
    %c0_23 = arith.constant 0 : index
    %c0_24 = arith.constant 0 : index
    %34 = vector.load %arg10[%c0_23, %c0_24] : memref<1x128xf32, #tpu.memory_space<vmem>>, vector<1x128xf32>
    %35 = vector.broadcast %34 : vector<1x128xf32> to vector<16x128xf32>
    %36 = arith.addf %33, %35 : vector<16x128xf32>
    %cst_25 = arith.constant 0.000000e+00 : f32
    %37 = vector.broadcast %cst_25 : f32 to vector<16x128xf32>
    %38 = arith.maximumf %36, %37 : vector<16x128xf32>
    %39 = arith.truncf %38 : vector<16x128xf32> to vector<16x128xbf16>
    %c0_26 = arith.constant 0 : index
    %c0_27 = arith.constant 0 : index
    %40 = vector.load %arg11[%c0_26, %c0_27] : memref<128x128xbf16, #tpu.memory_space<vmem>>, vector<128x128xbf16>
    %cst_28 = arith.constant dense<0.000000e+00> : vector<16x128xf32>
    %41 = tpu.matmul %39, %40, %cst_28 {dimension_numbers = #tpu.dot_dimension_numbers<[1], [0], [0], [1], [0, 0, 1, 1], [], []>} : vector<16x128xbf16>, vector<128x128xbf16>, vector<16x128xf32> -> vector<16x128xf32>
    %c0_29 = arith.constant 0 : index
    %c0_30 = arith.constant 0 : index
    %42 = vector.load %arg12[%c0_29, %c0_30] : memref<1x128xf32, #tpu.memory_space<vmem>>, vector<1x128xf32>
    %43 = vector.broadcast %42 : vector<1x128xf32> to vector<16x128xf32>
    %44 = arith.addf %41, %43 : vector<16x128xf32>
    %cst_31 = arith.constant 0.000000e+00 : f32
    %45 = vector.broadcast %cst_31 : f32 to vector<16x128xf32>
    %46 = arith.maximumf %44, %45 : vector<16x128xf32>
    %47 = arith.truncf %46 : vector<16x128xf32> to vector<16x128xbf16>
    %c0_32 = arith.constant 0 : index
    %c0_33 = arith.constant 0 : index
    %48 = vector.load %arg13[%c0_32, %c0_33] : memref<128x32xbf16, #tpu.memory_space<vmem>>, vector<128x32xbf16>
    %cst_34 = arith.constant dense<0.000000e+00> : vector<16x32xf32>
    %49 = tpu.matmul %47, %48, %cst_34 {dimension_numbers = #tpu.dot_dimension_numbers<[1], [0], [0], [1], [0, 0, 1, 1], [], []>} : vector<16x128xbf16>, vector<128x32xbf16>, vector<16x32xf32> -> vector<16x32xf32>
    %c0_35 = arith.constant 0 : index
    %c0_36 = arith.constant 0 : index
    %50 = vector.load %arg14[%c0_35, %c0_36] : memref<1x32xf32, #tpu.memory_space<vmem>>, vector<1x32xf32>
    %51 = vector.broadcast %50 : vector<1x32xf32> to vector<16x32xf32>
    %52 = arith.addf %49, %51 : vector<16x32xf32>
    %c0_37 = arith.constant 0 : index
    %c0_38 = arith.constant 0 : index
    %53 = vector.load %arg15[%c0_37, %c0_38] : memref<16x32xf32, #tpu.memory_space<vmem>>, vector<16x32xf32>
    tpu.vector_store %arg15[%c0_37, %c0_38], %52 {strides = array<i32>} : memref<16x32xf32, #tpu.memory_space<vmem>>, vector<16x32xf32>,
    %c0_39 = arith.constant 0 : index
    %c0_40 = arith.constant 0 : index
    %54 = vector.load %arg16[%c0_39, %c0_40] : memref<16x32xf32, #tpu.memory_space<vmem>>, vector<16x32xf32>
    tpu.vector_store %arg16[%c0_39, %c0_40], %21 {strides = array<i32>} : memref<16x32xf32, #tpu.memory_space<vmem>>, vector<16x32xf32>,
    return
  }
  func.func @transform_0(%arg0: i32) -> (i32, i32) {
    %c0_i32 = arith.constant 0 : i32
    %c0_i32_0 = arith.constant 0 : i32
    return %arg0, %c0_i32 : i32, i32
  }
  func.func @transform_1(%arg0: i32) -> (i32, i32) {
    %c0_i32 = arith.constant 0 : i32
    %c0_i32_0 = arith.constant 0 : i32
    %c0_i32_1 = arith.constant 0 : i32
    return %c0_i32, %c0_i32_0 : i32, i32
  }
  func.func @transform_2(%arg0: i32) -> (i32, i32) {
    %c0_i32 = arith.constant 0 : i32
    %c0_i32_0 = arith.constant 0 : i32
    %c0_i32_1 = arith.constant 0 : i32
    return %c0_i32, %c0_i32_0 : i32, i32
  }
  func.func @transform_3(%arg0: i32) -> (i32, i32) {
    %c0_i32 = arith.constant 0 : i32
    %c0_i32_0 = arith.constant 0 : i32
    %c0_i32_1 = arith.constant 0 : i32
    return %c0_i32, %c0_i32_0 : i32, i32
  }
  func.func @transform_4(%arg0: i32) -> (i32, i32) {
    %c0_i32 = arith.constant 0 : i32
    %c0_i32_0 = arith.constant 0 : i32
    %c0_i32_1 = arith.constant 0 : i32
    return %c0_i32, %c0_i32_0 : i32, i32
  }
  func.func @transform_5(%arg0: i32) -> (i32, i32) {
    %c0_i32 = arith.constant 0 : i32
    %c0_i32_0 = arith.constant 0 : i32
    %c0_i32_1 = arith.constant 0 : i32
    return %c0_i32, %c0_i32_0 : i32, i32
  }
  func.func @transform_6(%arg0: i32) -> (i32, i32) {
    %c0_i32 = arith.constant 0 : i32
    %c0_i32_0 = arith.constant 0 : i32
    %c0_i32_1 = arith.constant 0 : i32
    return %c0_i32, %c0_i32_0 : i32, i32
  }
  func.func @transform_7(%arg0: i32) -> (i32, i32) {
    %c0_i32 = arith.constant 0 : i32
    %c0_i32_0 = arith.constant 0 : i32
    return %arg0, %c0_i32 : i32, i32
  }
  func.func @transform_8(%arg0: i32) -> (i32, i32) {
    %c0_i32 = arith.constant 0 : i32
    %c0_i32_0 = arith.constant 0 : i32
    %c0_i32_1 = arith.constant 0 : i32
    return %c0_i32, %c0_i32_0 : i32, i32
  }
  func.func @transform_9(%arg0: i32) -> (i32, i32) {
    %c0_i32 = arith.constant 0 : i32
    %c0_i32_0 = arith.constant 0 : i32
    %c0_i32_1 = arith.constant 0 : i32
    return %c0_i32, %c0_i32_0 : i32, i32
  }
  func.func @transform_10(%arg0: i32) -> (i32, i32) {
    %c0_i32 = arith.constant 0 : i32
    %c0_i32_0 = arith.constant 0 : i32
    %c0_i32_1 = arith.constant 0 : i32
    return %c0_i32, %c0_i32_0 : i32, i32
  }
  func.func @transform_11(%arg0: i32) -> (i32, i32) {
    %c0_i32 = arith.constant 0 : i32
    %c0_i32_0 = arith.constant 0 : i32
    %c0_i32_1 = arith.constant 0 : i32
    return %c0_i32, %c0_i32_0 : i32, i32
  }
  func.func @transform_12(%arg0: i32) -> (i32, i32) {
    %c0_i32 = arith.constant 0 : i32
    %c0_i32_0 = arith.constant 0 : i32
    %c0_i32_1 = arith.constant 0 : i32
    return %c0_i32, %c0_i32_0 : i32, i32
  }
  func.func @transform_13(%arg0: i32) -> (i32, i32) {
    %c0_i32 = arith.constant 0 : i32
    %c0_i32_0 = arith.constant 0 : i32
    %c0_i32_1 = arith.constant 0 : i32
    return %c0_i32, %c0_i32_0 : i32, i32
  }
  func.func @transform_14(%arg0: i32) -> (i32, i32) {
    %c0_i32 = arith.constant 0 : i32
    %c0_i32_0 = arith.constant 0 : i32
    return %arg0, %c0_i32 : i32, i32
  }
  func.func @transform_15(%arg0: i32) -> (i32, i32) {
    %c0_i32 = arith.constant 0 : i32
    %c0_i32_0 = arith.constant 0 : i32
    return %arg0, %c0_i32 : i32, i32
  }
}

module attributes {stable_mosaic.version = 11 : i64} {
  func.func @kernel(%arg0: i32, %arg1: memref<16x32xbf16, #tpu.memory_space<vmem>>, %arg2: memref<32x128xbf16, #tpu.memory_space<vmem>>, %arg3: memref<1x128xf32, #tpu.memory_space<vmem>>, %arg4: memref<128x128xbf16, #tpu.memory_space<vmem>>, %arg5: memref<1x128xf32, #tpu.memory_space<vmem>>, %arg6: memref<128x32xbf16, #tpu.memory_space<vmem>>, %arg7: memref<1x32xf32, #tpu.memory_space<vmem>>, %arg8: memref<16x16xbf16, #tpu.memory_space<vmem>>, %arg9: memref<16x128xbf16, #tpu.memory_space<vmem>>, %arg10: memref<1x128xf32, #tpu.memory_space<vmem>>, %arg11: memref<128x128xbf16, #tpu.memory_space<vmem>>, %arg12: memref<1x128xf32, #tpu.memory_space<vmem>>, %arg13: memref<128x32xbf16, #tpu.memory_space<vmem>>, %arg14: memref<1x32xf32, #tpu.memory_space<vmem>>, %arg15: memref<16x32xf32, #tpu.memory_space<vmem>>, %arg16: memref<16x32xf32, #tpu.memory_space<vmem>>) attributes {dimension_semantics = [#tpu.dimension_semantics<parallel>], iteration_bounds = array<i64: 1>, scalar_prefetch = 0 : i64, scratch_operands = 0 : i64, tpu.core_type = #tpu.core_type<tc>, window_params = [{transform_indices = @transform_0, window_bounds = array<i64: 16, 32>}, {pipeline_mode = #tpu.pipeline_mode<synchronous>, transform_indices = @transform_1, window_bounds = array<i64: 32, 128>}, {pipeline_mode = #tpu.pipeline_mode<synchronous>, transform_indices = @transform_2, window_bounds = array<i64: 1, 128>}, {pipeline_mode = #tpu.pipeline_mode<synchronous>, transform_indices = @transform_3, window_bounds = array<i64: 128, 128>}, {pipeline_mode = #tpu.pipeline_mode<synchronous>, transform_indices = @transform_4, window_bounds = array<i64: 1, 128>}, {pipeline_mode = #tpu.pipeline_mode<synchronous>, transform_indices = @transform_5, window_bounds = array<i64: 128, 32>}, {pipeline_mode = #tpu.pipeline_mode<synchronous>, transform_indices = @transform_6, window_bounds = array<i64: 1, 32>}, {transform_indices = @transform_7, window_bounds = array<i64: 16, 16>}, {pipeline_mode = #tpu.pipeline_mode<synchronous>, transform_indices = @transform_8, window_bounds = array<i64: 16, 128>}, {pipeline_mode = #tpu.pipeline_mode<synchronous>, transform_indices = @transform_9, window_bounds = array<i64: 1, 128>}, {pipeline_mode = #tpu.pipeline_mode<synchronous>, transform_indices = @transform_10, window_bounds = array<i64: 128, 128>}, {pipeline_mode = #tpu.pipeline_mode<synchronous>, transform_indices = @transform_11, window_bounds = array<i64: 1, 128>}, {pipeline_mode = #tpu.pipeline_mode<synchronous>, transform_indices = @transform_12, window_bounds = array<i64: 128, 32>}, {pipeline_mode = #tpu.pipeline_mode<synchronous>, transform_indices = @transform_13, window_bounds = array<i64: 1, 32>}, {transform_indices = @transform_14, window_bounds = array<i64: 16, 32>}, {transform_indices = @transform_15, window_bounds = array<i64: 16, 32>}]} {
    %c0 = arith.constant 0 : index
    %c0_0 = arith.constant 0 : index
    %0 = vector.load %arg1[%c0, %c0_0] : memref<16x32xbf16, #tpu.memory_space<vmem>>, vector<16x32xbf16>
    %c0_1 = arith.constant 0 : index
    %c0_2 = arith.constant 0 : index
    %1 = vector.load %arg2[%c0_1, %c0_2] : memref<32x128xbf16, #tpu.memory_space<vmem>>, vector<32x128xbf16>
    %cst = arith.constant dense<0.000000e+00> : vector<16x128xf32>
    %2 = tpu.matmul %0, %1, %cst {dimension_numbers = #tpu.dot_dimension_numbers<[1], [0], [0], [1], [0, 0, 1, 1], [], []>} : vector<16x32xbf16>, vector<32x128xbf16>, vector<16x128xf32> -> vector<16x128xf32>
    %c0_3 = arith.constant 0 : index
    %c0_4 = arith.constant 0 : index
    %3 = vector.load %arg3[%c0_3, %c0_4] : memref<1x128xf32, #tpu.memory_space<vmem>>, vector<1x128xf32>
    %4 = vector.broadcast %3 : vector<1x128xf32> to vector<16x128xf32>
    %5 = arith.addf %2, %4 : vector<16x128xf32>
    %cst_5 = arith.constant 0.000000e+00 : f32
    %6 = vector.broadcast %cst_5 : f32 to vector<16x128xf32>
    %7 = arith.maximumf %5, %6 : vector<16x128xf32>
    %8 = arith.truncf %7 : vector<16x128xf32> to vector<16x128xbf16>
    %c0_6 = arith.constant 0 : index
    %c0_7 = arith.constant 0 : index
    %9 = vector.load %arg4[%c0_6, %c0_7] : memref<128x128xbf16, #tpu.memory_space<vmem>>, vector<128x128xbf16>
    %cst_8 = arith.constant dense<0.000000e+00> : vector<16x128xf32>
    %10 = tpu.matmul %8, %9, %cst_8 {dimension_numbers = #tpu.dot_dimension_numbers<[1], [0], [0], [1], [0, 0, 1, 1], [], []>} : vector<16x128xbf16>, vector<128x128xbf16>, vector<16x128xf32> -> vector<16x128xf32>
    %c0_9 = arith.constant 0 : index
    %c0_10 = arith.constant 0 : index
    %11 = vector.load %arg5[%c0_9, %c0_10] : memref<1x128xf32, #tpu.memory_space<vmem>>, vector<1x128xf32>
    %12 = vector.broadcast %11 : vector<1x128xf32> to vector<16x128xf32>
    %13 = arith.addf %10, %12 : vector<16x128xf32>
    %cst_11 = arith.constant 0.000000e+00 : f32
    %14 = vector.broadcast %cst_11 : f32 to vector<16x128xf32>
    %15 = arith.maximumf %13, %14 : vector<16x128xf32>
    %16 = arith.truncf %15 : vector<16x128xf32> to vector<16x128xbf16>
    %c0_12 = arith.constant 0 : index
    %c0_13 = arith.constant 0 : index
    %17 = vector.load %arg6[%c0_12, %c0_13] : memref<128x32xbf16, #tpu.memory_space<vmem>>, vector<128x32xbf16>
    %cst_14 = arith.constant dense<0.000000e+00> : vector<16x32xf32>
    %18 = tpu.matmul %16, %17, %cst_14 {dimension_numbers = #tpu.dot_dimension_numbers<[1], [0], [0], [1], [0, 0, 1, 1], [], []>} : vector<16x128xbf16>, vector<128x32xbf16>, vector<16x32xf32> -> vector<16x32xf32>
    %c0_15 = arith.constant 0 : index
    %c0_16 = arith.constant 0 : index
    %19 = vector.load %arg7[%c0_15, %c0_16] : memref<1x32xf32, #tpu.memory_space<vmem>>, vector<1x32xf32>
    %20 = vector.broadcast %19 : vector<1x32xf32> to vector<16x32xf32>
    %21 = arith.addf %18, %20 : vector<16x32xf32>
    %22 = vector.extract_strided_slice %21 {offsets = [0, 0], sizes = [16, 16], strides = [1, 1]} : vector<16x32xf32> to vector<16x16xf32>
    %23 = vector.extract_strided_slice %21 {offsets = [0, 16], sizes = [16, 16], strides = [1, 1]} : vector<16x32xf32> to vector<16x16xf32>
    %cst_17 = arith.constant 5.000000e-01 : f32
    %24 = vector.broadcast %cst_17 : f32 to vector<16x16xf32>
    %25 = arith.mulf %24, %23 : vector<16x16xf32>
    %26 = math.exp %25 : vector<16x16xf32>
    %c0_18 = arith.constant 0 : index
    %c0_19 = arith.constant 0 : index
    %27 = vector.load %arg8[%c0_18, %c0_19] : memref<16x16xbf16, #tpu.memory_space<vmem>>, vector<16x16xbf16>
    %28 = arith.extf %27 : vector<16x16xbf16> to vector<16x16xf32>
    %29 = arith.mulf %26, %28 : vector<16x16xf32>
    %30 = arith.addf %22, %29 : vector<16x16xf32>
    %31 = arith.truncf %30 : vector<16x16xf32> to vector<16x16xbf16>
    %c0_20 = arith.constant 0 : index
    %c0_21 = arith.constant 0 : index
    %32 = vector.load %arg9[%c0_20, %c0_21] : memref<16x128xbf16, #tpu.memory_space<vmem>>, vector<16x128xbf16>
    %cst_22 = arith.constant dense<0.000000e+00> : vector<16x128xf32>
    %33 = tpu.matmul %31, %32, %cst_22 {dimension_numbers = #tpu.dot_dimension_numbers<[1], [0], [0], [1], [0, 0, 1, 1], [], []>} : vector<16x16xbf16>, vector<16x128xbf16>, vector<16x128xf32> -> vector<16x128xf32>
    %c0_23 = arith.constant 0 : index
    %c0_24 = arith.constant 0 : index
    %34 = vector.load %arg10[%c0_23, %c0_24] : memref<1x128xf32, #tpu.memory_space<vmem>>, vector<1x128xf32>
    %35 = vector.broadcast %34 : vector<1x128xf32> to vector<16x128xf32>
    %36 = arith.addf %33, %35 : vector<16x128xf32>
    %cst_25 = arith.constant 0.000000e+00 : f32
    %37 = vector.broadcast %cst_25 : f32 to vector<16x128xf32>
    %38 = arith.maximumf %36, %37 : vector<16x128xf32>
    %39 = arith.truncf %38 : vector<16x128xf32> to vector<16x128xbf16>
    %c0_26 = arith.constant 0 : index
    %c0_27 = arith.constant 0 : index
    %40 = vector.load %arg11[%c0_26, %c0_27] : memref<128x128xbf16, #tpu.memory_space<vmem>>, vector<128x128xbf16>
    %cst_28 = arith.constant dense<0.000000e+00> : vector<16x128xf32>
    %41 = tpu.matmul %39, %40, %cst_28 {dimension_numbers = #tpu.dot_dimension_numbers<[1], [0], [0], [1], [0, 0, 1, 1], [], []>} : vector<16x128xbf16>, vector<128x128xbf16>, vector<16x128xf32> -> vector<16x128xf32>
    %c0_29 = arith.constant 0 : index
    %c0_30 = arith.constant 0 : index
    %42 = vector.load %arg12[%c0_29, %c0_30] : memref<1x128xf32, #tpu.memory_space<vmem>>, vector<1x128xf32>
    %43 = vector.broadcast %42 : vector<1x128xf32> to vector<16x128xf32>
    %44 = arith.addf %41, %43 : vector<16x128xf32>
    %cst_31 = arith.constant 0.000000e+00 : f32
    %45 = vector.broadcast %cst_31 : f32 to vector<16x128xf32>
    %46 = arith.maximumf %44, %45 : vector<16x128xf32>
    %47 = arith.truncf %46 : vector<16x128xf32> to vector<16x128xbf16>
    %c0_32 = arith.constant 0 : index
    %c0_33 = arith.constant 0 : index
    %48 = vector.load %arg13[%c0_32, %c0_33] : memref<128x32xbf16, #tpu.memory_space<vmem>>, vector<128x32xbf16>
    %cst_34 = arith.constant dense<0.000000e+00> : vector<16x32xf32>
    %49 = tpu.matmul %47, %48, %cst_34 {dimension_numbers = #tpu.dot_dimension_numbers<[1], [0], [0], [1], [0, 0, 1, 1], [], []>} : vector<16x128xbf16>, vector<128x32xbf16>, vector<16x32xf32> -> vector<16x32xf32>
    %c0_35 = arith.constant 0 : index
    %c0_36 = arith.constant 0 : index
    %50 = vector.load %arg14[%c0_35, %c0_36] : memref<1x32xf32, #tpu.memory_space<vmem>>, vector<1x32xf32>
    %51 = vector.broadcast %50 : vector<1x32xf32> to vector<16x32xf32>
    %52 = arith.addf %49, %51 : vector<16x32xf32>
    %c0_37 = arith.constant 0 : index
    %c0_38 = arith.constant 0 : index
    %53 = vector.load %arg15[%c0_37, %c0_38] : memref<16x32xf32, #tpu.memory_space<vmem>>, vector<16x32xf32>
    tpu.vector_store %arg15[%c0_37, %c0_38], %52 {strides = array<i32>} : memref<16x32xf32, #tpu.memory_space<vmem>>, vector<16x32xf32>,
    %c0_39 = arith.constant 0 : index
    %c0_40 = arith.constant 0 : index
    %54 = vector.load %arg16[%c0_39, %c0_40] : memref<16x32xf32, #tpu.memory_space<vmem>>, vector<16x32xf32>
    tpu.vector_store %arg16[%c0_39, %c0_40], %21 {strides = array<i32>} : memref<16x32xf32, #tpu.memory_space<vmem>>, vector<16x32xf32>,
    return
  }
  func.func @transform_0(%arg0: i32) -> (i32, i32) {
    %c0_i32 = arith.constant 0 : i32
    %c0_i32_0 = arith.constant 0 : i32
    return %arg0, %c0_i32 : i32, i32
  }
  func.func @transform_1(%arg0: i32) -> (i32, i32) {
    %c0_i32 = arith.constant 0 : i32
    %c0_i32_0 = arith.constant 0 : i32
    %c0_i32_1 = arith.constant 0 : i32
    return %c0_i32, %c0_i32_0 : i32, i32
  }
  func.func @transform_2(%arg0: i32) -> (i32, i32) {
    %c0_i32 = arith.constant 0 : i32
    %c0_i32_0 = arith.constant 0 : i32
    %c0_i32_1 = arith.constant 0 : i32
    return %c0_i32, %c0_i32_0 : i32, i32
  }
  func.func @transform_3(%arg0: i32) -> (i32, i32) {
    %c0_i32 = arith.constant 0 : i32
    %c0_i32_0 = arith.constant 0 : i32
    %c0_i32_1 = arith.constant 0 : i32
    return %c0_i32, %c0_i32_0 : i32, i32
  }
  func.func @transform_4(%arg0: i32) -> (i32, i32) {
    %c0_i32 = arith.constant 0 : i32
    %c0_i32_0 = arith.constant 0 : i32
    %c0_i32_1 = arith.constant 0 : i32
    return %c0_i32, %c0_i32_0 : i32, i32
  }
  func.func @transform_5(%arg0: i32) -> (i32, i32) {
    %c0_i32 = arith.constant 0 : i32
    %c0_i32_0 = arith.constant 0 : i32
    %c0_i32_1 = arith.constant 0 : i32
    return %c0_i32, %c0_i32_0 : i32, i32
  }
  func.func @transform_6(%arg0: i32) -> (i32, i32) {
    %c0_i32 = arith.constant 0 : i32
    %c0_i32_0 = arith.constant 0 : i32
    %c0_i32_1 = arith.constant 0 : i32
    return %c0_i32, %c0_i32_0 : i32, i32
  }
  func.func @transform_7(%arg0: i32) -> (i32, i32) {
    %c0_i32 = arith.constant 0 : i32
    %c0_i32_0 = arith.constant 0 : i32
    return %arg0, %c0_i32 : i32, i32
  }
  func.func @transform_8(%arg0: i32) -> (i32, i32) {
    %c0_i32 = arith.constant 0 : i32
    %c0_i32_0 = arith.constant 0 : i32
    %c0_i32_1 = arith.constant 0 : i32
    return %c0_i32, %c0_i32_0 : i32, i32
  }
  func.func @transform_9(%arg0: i32) -> (i32, i32) {
    %c0_i32 = arith.constant 0 : i32
    %c0_i32_0 = arith.constant 0 : i32
    %c0_i32_1 = arith.constant 0 : i32
    return %c0_i32, %c0_i32_0 : i32, i32
  }
  func.func @transform_10(%arg0: i32) -> (i32, i32) {
    %c0_i32 = arith.constant 0 : i32
    %c0_i32_0 = arith.constant 0 : i32
    %c0_i32_1 = arith.constant 0 : i32
    return %c0_i32, %c0_i32_0 : i32, i32
  }
  func.func @transform_11(%arg0: i32) -> (i32, i32) {
    %c0_i32 = arith.constant 0 : i32
    %c0_i32_0 = arith.constant 0 : i32
    %c0_i32_1 = arith.constant 0 : i32
    return %c0_i32, %c0_i32_0 : i32, i32
  }
  func.func @transform_12(%arg0: i32) -> (i32, i32) {
    %c0_i32 = arith.constant 0 : i32
    %c0_i32_0 = arith.constant 0 : i32
    %c0_i32_1 = arith.constant 0 : i32
    return %c0_i32, %c0_i32_0 : i32, i32
  }
  func.func @transform_13(%arg0: i32) -> (i32, i32) {
    %c0_i32 = arith.constant 0 : i32
    %c0_i32_0 = arith.constant 0 : i32
    %c0_i32_1 = arith.constant 0 : i32
    return %c0_i32, %c0_i32_0 : i32, i32
  }
  func.func @transform_14(%arg0: i32) -> (i32, i32) {
    %c0_i32 = arith.constant 0 : i32
    %c0_i32_0 = arith.constant 0 : i32
    return %arg0, %c0_i32 : i32, i32
  }
  func.func @transform_15(%arg0: i32) -> (i32, i32) {
    %c0_i32 = arith.constant 0 : i32
    %c0_i32_0 = arith.constant 0 : i32
    return %arg0, %c0_i32 : i32, i32
  }
}

</mosaic_0001>

<llo_original>
// kernel: vae_forward_pallas.1
$region0: #{vae_forward_pallas.1}
  #allocation0 [shape = 'u32[]', space=smem, size = 0x4, offset = 0x4, fixed_abs, tag = 'smem constant byte address 0x4 - core index']
  #allocation1 [shape = 'u32[144,128]{1,0:T(1,128)}', space=vmem, size = 0x12000, scoped, tag = 'internal scratch']
  %s0 = inlined_call_operand.vmem [shape: bf16[16,32], index: 0, kind: input, shape index: {}]
  %s1 = inlined_call_operand.vmem [shape: bf16[32,128], index: 1, kind: input, shape index: {}]
  %s2 = inlined_call_operand.vmem [shape: f32[1,128], index: 2, kind: input, shape index: {}]
  %s3 = inlined_call_operand.vmem [shape: bf16[128,128], index: 3, kind: input, shape index: {}]
  %s4 = inlined_call_operand.vmem [shape: f32[1,128], index: 4, kind: input, shape index: {}]
  %s5 = inlined_call_operand.vmem [shape: bf16[128,32], index: 5, kind: input, shape index: {}]
  %s6 = inlined_call_operand.vmem [shape: f32[1,32], index: 6, kind: input, shape index: {}]
  %s7 = inlined_call_operand.vmem [shape: bf16[16,16], index: 7, kind: input, shape index: {}]
  %s8 = inlined_call_operand.vmem [shape: bf16[16,128], index: 8, kind: input, shape index: {}]
  %s9 = inlined_call_operand.vmem [shape: f32[1,128], index: 9, kind: input, shape index: {}]
  %s10 = inlined_call_operand.vmem [shape: bf16[128,128], index: 10, kind: input, shape index: {}]
  %s11 = inlined_call_operand.vmem [shape: f32[1,128], index: 11, kind: input, shape index: {}]
  %s12 = inlined_call_operand.vmem [shape: bf16[128,32], index: 12, kind: input, shape index: {}]
  %s13 = inlined_call_operand.vmem [shape: f32[1,32], index: 13, kind: input, shape index: {}]
  %s14 = inlined_call_operand.vmem [shape: f32[16,32], index: 14, kind: output, shape index: {0}]
  %s15 = inlined_call_operand.vmem [shape: f32[16,32], index: 15, kind: output, shape index: {1}]
  %16 = xla_tuple %s14, %s15
  %s17 = sld [smem:[#allocation0]]
  $region74: #{vae_forward_pallas.1} parent=0
    _
  %s19 = ssub.s32 1, %s17
  %s20 = scalar_select 0, %s19, %s17
  // Predicated region
  $region2: #{vae_forward_pallas.1} parent=0 // pred_check
    _
  $region3: #{vae_forward_pallas.1} parent=0 // pred_check_branch
    %22 = sbr.rel (0) target = $region5
  $region4: #{vae_forward_pallas.1} parent=0 // pred_region
    _
  $region5: #{vae_forward_pallas.1} parent=0 // pred_fallthru
    _
  // Predicated region
  $region6: #{vae_forward_pallas.1} parent=0 // pred_check
    _
  $region7: #{vae_forward_pallas.1} parent=0 // pred_check_branch
    %24 = sbr.rel (0) target = $region9
  $region8: #{vae_forward_pallas.1} parent=0 // pred_region
    _
  $region9: #{vae_forward_pallas.1} parent=0 // pred_fallthru
    _
  // Predicated region
  $region10: #{vae_forward_pallas.1} parent=0 // pred_check
    _
  $region11: #{vae_forward_pallas.1} parent=0 // pred_check_branch
    %26 = sbr.rel (0) target = $region13
  $region12: #{vae_forward_pallas.1} parent=0 // pred_region
    _
  $region13: #{vae_forward_pallas.1} parent=0 // pred_fallthru
    _
  // Predicated region
  $region14: #{vae_forward_pallas.1} parent=0 // pred_check
    _
  $region15: #{vae_forward_pallas.1} parent=0 // pred_check_branch
    %28 = sbr.rel (0) target = $region17
  $region16: #{vae_forward_pallas.1} parent=0 // pred_region
    _
  $region17: #{vae_forward_pallas.1} parent=0 // pred_fallthru
    _
  // Predicated region
  $region18: #{vae_forward_pallas.1} parent=0 // pred_check
    _
  $region19: #{vae_forward_pallas.1} parent=0 // pred_check_branch
    %30 = sbr.rel (0) target = $region21
  $region20: #{vae_forward_pallas.1} parent=0 // pred_region
    _
  $region21: #{vae_forward_pallas.1} parent=0 // pred_fallthru
    _
  // Predicated region
  $region22: #{vae_forward_pallas.1} parent=0 // pred_check
    _
  $region23: #{vae_forward_pallas.1} parent=0 // pred_check_branch
    %32 = sbr.rel (0) target = $region25
  $region24: #{vae_forward_pallas.1} parent=0 // pred_region
    _
  $region25: #{vae_forward_pallas.1} parent=0 // pred_fallthru
    _
  // Predicated region
  $region26: #{vae_forward_pallas.1} parent=0 // pred_check
    _
  $region27: #{vae_forward_pallas.1} parent=0 // pred_check_branch
    %34 = sbr.rel (0) target = $region29
  $region28: #{vae_forward_pallas.1} parent=0 // pred_region
    _
  $region29: #{vae_forward_pallas.1} parent=0 // pred_fallthru
    _
  // Predicated region
  $region30: #{vae_forward_pallas.1} parent=0 // pred_check
    _
  $region31: #{vae_forward_pallas.1} parent=0 // pred_check_branch
    %36 = sbr.rel (0) target = $region33
  $region32: #{vae_forward_pallas.1} parent=0 // pred_region
    _
  $region33: #{vae_forward_pallas.1} parent=0 // pred_fallthru
    _
  // Predicated region
  $region34: #{vae_forward_pallas.1} parent=0 // pred_check
    _
  $region35: #{vae_forward_pallas.1} parent=0 // pred_check_branch
    %38 = sbr.rel (0) target = $region37
  $region36: #{vae_forward_pallas.1} parent=0 // pred_region
    _
  $region37: #{vae_forward_pallas.1} parent=0 // pred_fallthru
    _
  // Predicated region
  $region38: #{vae_forward_pallas.1} parent=0 // pred_check
    _
  $region39: #{vae_forward_pallas.1} parent=0 // pred_check_branch
    %40 = sbr.rel (0) target = $region41
  $region40: #{vae_forward_pallas.1} parent=0 // pred_region
    _
  $region41: #{vae_forward_pallas.1} parent=0 // pred_fallthru
    _
  // Predicated region
  $region42: #{vae_forward_pallas.1} parent=0 // pred_check
    _
  $region43: #{vae_forward_pallas.1} parent=0 // pred_check_branch
    %42 = sbr.rel (0) target = $region45
  $region44: #{vae_forward_pallas.1} parent=0 // pred_region
    _
  $region45: #{vae_forward_pallas.1} parent=0 // pred_fallthru
    _
  // Predicated region
  $region46: #{vae_forward_pallas.1} parent=0 // pred_check
    _
  $region47: #{vae_forward_pallas.1} parent=0 // pred_check_branch
    %44 = sbr.rel (0) target = $region49
  $region48: #{vae_forward_pallas.1} parent=0 // pred_region
    _
  $region49: #{vae_forward_pallas.1} parent=0 // pred_fallthru
    _
  // Predicated region
  $region50: #{vae_forward_pallas.1} parent=0 // pred_check
    _
  $region51: #{vae_forward_pallas.1} parent=0 // pred_check_branch
    %46 = sbr.rel (0) target = $region53
  $region52: #{vae_forward_pallas.1} parent=0 // pred_region
    _
  $region53: #{vae_forward_pallas.1} parent=0 // pred_fallthru
    _
  // Predicated region
  $region54: #{vae_forward_pallas.1} parent=0 // pred_check
    _
  $region55: #{vae_forward_pallas.1} parent=0 // pred_check_branch
    %48 = sbr.rel (0) target = $region57
  $region56: #{vae_forward_pallas.1} parent=0 // pred_region
    _
  $region57: #{vae_forward_pallas.1} parent=0 // pred_fallthru
    _
  %v50 = vld [vmem:[%s0] sm:$0xf]
  %v51 = vld [vmem:[%s0 + $0x4] sm:$0xf]
  %v52 = vld [vmem:[%s1] sm:$0xf]
  %v53 = vld [vmem:[%s1 + $0x4] sm:$0xf]
  %v54 = vld [vmem:[%s1 + $0x8] sm:$0xf]
  %v55 = vld [vmem:[%s1 + $0xc] sm:$0xf]
  %v56 = vld [vmem:[%s2] sm:$0x1]
  %v58 = vlaneseq
  %v59 = vshrl.u32 %v58, 7
  %v60 = vsub.s32 0, %v59
  %v61 = vrot.slane %v56, %v60
  %v65 = vunpack.c.l.b16 %v50
  %v66 = vunpack.c.l.b16 %v51
  %v67 = vpack.c.b16 %v66, %v65
  %v72 = vunpack.c.l.b16 %v52
  %v73 = vunpack.c.l.b16 %v53
  %v74 = vunpack.c.l.b16 %v54
  %v75 = vunpack.c.l.b16 %v55
  %v76 = vpack.c.b16 %v73, %v72
  %v77 = vpack.c.b16 %v75, %v74
  %vm80 = vcmask 261120
  %v82 = vsel %vm80, %v67, 0
  %84 = vmatprep.subr.bf16.mxu0 0
  %85 = vmatpush1.bf16.msra.mxu0 %v76
  %86 = vmatprep.subr.bf16.mxu0 0
  %87 = vmatpush1.bf16.msra.mxu0 %v77
  %88 = vmatprep.subr.bf16.mxu0 0
  %89 = vmatpush1.bf16.msra.mxu0 0
  %90 = vmatprep.subr.bf16.mxu0 0
  %91 = vmatpush1.bf16.msra.mxu0 0
  %92 = vmatprep.subr.bf16.mxu0 0
  %93 = vmatpush1.bf16.msra.mxu0 0
  %94 = vmatprep.subr.bf16.mxu0 0
  %95 = vmatpush1.bf16.msra.mxu0 0
  %96 = vmatprep.subr.bf16.mxu0 0
  %97 = vmatpush1.bf16.msra.mxu0 0
  %98 = vmatprep.subr.bf16.mxu0 0
  %99 = vmatpush1.bf16.msra.mxu0 0
  %100 = vmatprep.subr.bf16.mxu0 0
  %101 = vmatpush1.bf16.msra.mxu0 0
  %102 = vmatprep.subr.bf16.mxu0 0
  %103 = vmatpush1.bf16.msra.mxu0 0
  %104 = vmatprep.subr.bf16.mxu0 0
  %105 = vmatpush1.bf16.msra.mxu0 0
  %106 = vmatprep.subr.bf16.mxu0 0
  %107 = vmatpush1.bf16.msra.mxu0 0
  %108 = vmatprep.subr.bf16.mxu0 0
  %109 = vmatpush1.bf16.msra.mxu0 0
  %110 = vmatprep.subr.bf16.mxu0 0
  %111 = vmatpush1.bf16.msra.mxu0 0
  %112 = vmatprep.subr.bf16.mxu0 0
  %113 = vmatpush1.bf16.msra.mxu0 0
  %114 = vmatprep.subr.bf16.mxu0 0
  %115 = vmatpush1.bf16.msra.mxu0 0
  %116 = vmatprep.mubr.bf16.mxu0 0
  %117 = vmatmul.mubr.bf16.gmra.mrb[0].mxu0 %v82
  %v118 = vpop.f32.mrb[0].mxu0
  %v119 = vadd.f32 %v61, %v118
  %v120 = vpop.f32.mrb[0].mxu0
  %v121 = vpop.f32.mrb[0].mxu0
  %v122 = vadd.f32 %v61, %v121
  %v123 = vpop.f32.mrb[0].mxu0
  %124 = vdwg.mxu0
  %v125 = vmax.f32 %v119, 0.0
  %v126 = vmax.f32 %v122, 0.0
  %v127 = vpack.c.bf16 %v126, %v125
  %v128 = vld [vmem:[%s3] sm:$0xf]
  %v129 = vld [vmem:[%s3 + $0x4] sm:$0xf]
  %v130 = vld [vmem:[%s3 + $0x8] sm:$0xf]
  %v131 = vld [vmem:[%s3 + $0xc] sm:$0xf]
  %v132 = vld [vmem:[%s3 + $0x10] sm:$0xf]
  %v133 = vld [vmem:[%s3 + $0x14] sm:$0xf]
  %v134 = vld [vmem:[%s3 + $0x18] sm:$0xf]
  %v135 = vld [vmem:[%s3 + $0x1c] sm:$0xf]
  %v136 = vld [vmem:[%s3 + $0x20] sm:$0xf]
  %v137 = vld [vmem:[%s3 + $0x24] sm:$0xf]
  %v138 = vld [vmem:[%s3 + $0x28] sm:$0xf]
  %v139 = vld [vmem:[%s3 + $0x2c] sm:$0xf]
  %v140 = vld [vmem:[%s3 + $0x30] sm:$0xf]
  %v141 = vld [vmem:[%s3 + $0x34] sm:$0xf]
  %v142 = vld [vmem:[%s3 + $0x38] sm:$0xf]
  %v143 = vld [vmem:[%s3 + $0x3c] sm:$0xf]
  %v144 = vld [vmem:[%s4] sm:$0x1]
  %v146 = vlaneseq
  %v147 = vshrl.u32 %v146, 7
  %v148 = vsub.s32 0, %v147
  %v149 = vrot.slane %v144, %v148
  %v167 = vunpack.c.l.b16 %v128
  %v168 = vunpack.c.l.b16 %v129
  %v169 = vunpack.c.l.b16 %v130
  %v170 = vunpack.c.l.b16 %v131
  %v171 = vunpack.c.l.b16 %v132
  %v172 = vunpack.c.l.b16 %v133
  %v173 = vunpack.c.l.b16 %v134
  %v174 = vunpack.c.l.b16 %v135
  %v175 = vunpack.c.l.b16 %v136
  %v176 = vunpack.c.l.b16 %v137
  %v177 = vunpack.c.l.b16 %v138
  %v178 = vunpack.c.l.b16 %v139
  %v179 = vunpack.c.l.b16 %v140
  %v180 = vunpack.c.l.b16 %v141
  %v181 = vunpack.c.l.b16 %v142
  %v182 = vunpack.c.l.b16 %v143
  %v183 = vpack.c.b16 %v168, %v167
  %v184 = vpack.c.b16 %v170, %v169
  %v185 = vpack.c.b16 %v172, %v171
  %v186 = vpack.c.b16 %v174, %v173
  %v187 = vpack.c.b16 %v176, %v175
  %v188 = vpack.c.b16 %v178, %v177
  %v189 = vpack.c.b16 %v180, %v179
  %v190 = vpack.c.b16 %v182, %v181
  %199 = vmatprep.subr.bf16.mxu0 0
  %200 = vmatpush1.bf16.msra.mxu0 %v183
  %201 = vmatprep.subr.bf16.mxu0 0
  %202 = vmatpush1.bf16.msra.mxu0 %v184
  %203 = vmatprep.subr.bf16.mxu0 0
  %204 = vmatpush1.bf16.msra.mxu0 %v185
  %205 = vmatprep.subr.bf16.mxu0 0
  %206 = vmatpush1.bf16.msra.mxu0 %v186
  %207 = vmatprep.subr.bf16.mxu0 0
  %208 = vmatpush1.bf16.msra.mxu0 %v187
  %209 = vmatprep.subr.bf16.mxu0 0
  %210 = vmatpush1.bf16.msra.mxu0 %v188
  %211 = vmatprep.subr.bf16.mxu0 0
  %212 = vmatpush1.bf16.msra.mxu0 %v189
  %213 = vmatprep.subr.bf16.mxu0 0
  %214 = vmatpush1.bf16.msra.mxu0 %v190
  %215 = vmatprep.subr.bf16.mxu0 0
  %216 = vmatpush1.bf16.msra.mxu0 0
  %217 = vmatprep.subr.bf16.mxu0 0
  %218 = vmatpush1.bf16.msra.mxu0 0
  %219 = vmatprep.subr.bf16.mxu0 0
  %220 = vmatpush1.bf16.msra.mxu0 0
  %221 = vmatprep.subr.bf16.mxu0 0
  %222 = vmatpush1.bf16.msra.mxu0 0
  %223 = vmatprep.subr.bf16.mxu0 0
  %224 = vmatpush1.bf16.msra.mxu0 0
  %225 = vmatprep.subr.bf16.mxu0 0
  %226 = vmatpush1.bf16.msra.mxu0 0
  %227 = vmatprep.subr.bf16.mxu0 0
  %228 = vmatpush1.bf16.msra.mxu0 0
  %229 = vmatprep.subr.bf16.mxu0 0
  %230 = vmatpush1.bf16.msra.mxu0 0
  %231 = vmatprep.mubr.bf16.mxu0 0
  %232 = vmatmul.mubr.bf16.gmra.mrb[0].mxu0 %v127
  %v233 = vpop.f32.mrb[0].mxu0
  %v234 = vadd.f32 %v149, %v233
  %v235 = vpop.f32.mrb[0].mxu0
  %v236 = vpop.f32.mrb[0].mxu0
  %v237 = vadd.f32 %v149, %v236
  %v238 = vpop.f32.mrb[0].mxu0
  %239 = vdwg.mxu0
  %v240 = vmax.f32 %v234, 0.0
  %v241 = vmax.f32 %v237, 0.0
  %v242 = vpack.c.bf16 %v241, %v240
  %v243 = vld [vmem:[%s5] sm:$0xf]
  %v244 = vld [vmem:[%s5 + $0x4] sm:$0xf]
  %v245 = vld [vmem:[%s5 + $0x8] sm:$0xf]
  %v246 = vld [vmem:[%s5 + $0xc] sm:$0xf]
  %v247 = vld [vmem:[%s5 + $0x10] sm:$0xf]
  %v248 = vld [vmem:[%s5 + $0x14] sm:$0xf]
  %v249 = vld [vmem:[%s5 + $0x18] sm:$0xf]
  %v250 = vld [vmem:[%s5 + $0x1c] sm:$0xf]
  %v251 = vld [vmem:[%s5 + $0x20] sm:$0xf]
  %v252 = vld [vmem:[%s5 + $0x24] sm:$0xf]
  %v253 = vld [vmem:[%s5 + $0x28] sm:$0xf]
  %v254 = vld [vmem:[%s5 + $0x2c] sm:$0xf]
  %v255 = vld [vmem:[%s5 + $0x30] sm:$0xf]
  %v256 = vld [vmem:[%s5 + $0x34] sm:$0xf]
  %v257 = vld [vmem:[%s5 + $0x38] sm:$0xf]
  %v258 = vld [vmem:[%s5 + $0x3c] sm:$0xf]
  %v259 = vld [vmem:[%s6] sm:$0x1]
  %v261 = vlaneseq
  %v262 = vshrl.u32 %v261, 7
  %v263 = vsub.s32 0, %v262
  %v264 = vrot.slane %v259, %v263
  %v282 = vunpack.c.l.b16 %v243
  %v283 = vunpack.c.l.b16 %v244
  %v284 = vunpack.c.l.b16 %v245
  %v285 = vunpack.c.l.b16 %v246
  %v286 = vunpack.c.l.b16 %v247
  %v287 = vunpack.c.l.b16 %v248
  %v288 = vunpack.c.l.b16 %v249
  %v289 = vunpack.c.l.b16 %v250
  %v290 = vunpack.c.l.b16 %v251
  %v291 = vunpack.c.l.b16 %v252
  %v292 = vunpack.c.l.b16 %v253
  %v293 = vunpack.c.l.b16 %v254
  %v294 = vunpack.c.l.b16 %v255
  %v295 = vunpack.c.l.b16 %v256
  %v296 = vunpack.c.l.b16 %v257
  %v297 = vunpack.c.l.b16 %v258
  %v298 = vpack.c.b16 %v283, %v282
  %v299 = vpack.c.b16 %v285, %v284
  %v300 = vpack.c.b16 %v287, %v286
  %v301 = vpack.c.b16 %v289, %v288
  %v302 = vpack.c.b16 %v291, %v290
  %v303 = vpack.c.b16 %v293, %v292
  %v304 = vpack.c.b16 %v295, %v294
  %v305 = vpack.c.b16 %v297, %v296
  %314 = vmatprep.subr.bf16.mxu0 0
  %315 = vmatpush1.bf16.msra.mxu0 %v298
  %316 = vmatprep.subr.bf16.mxu0 0
  %317 = vmatpush1.bf16.msra.mxu0 %v299
  %318 = vmatprep.subr.bf16.mxu0 0
  %319 = vmatpush1.bf16.msra.mxu0 %v300
  %320 = vmatprep.subr.bf16.mxu0 0
  %321 = vmatpush1.bf16.msra.mxu0 %v301
  %322 = vmatprep.subr.bf16.mxu0 0
  %323 = vmatpush1.bf16.msra.mxu0 %v302
  %324 = vmatprep.subr.bf16.mxu0 0
  %325 = vmatpush1.bf16.msra.mxu0 %v303
  %326 = vmatprep.subr.bf16.mxu0 0
  %327 = vmatpush1.bf16.msra.mxu0 %v304
  %328 = vmatprep.subr.bf16.mxu0 0
  %329 = vmatpush1.bf16.msra.mxu0 %v305
  %330 = vmatprep.subr.bf16.mxu0 0
  %331 = vmatpush1.bf16.msra.mxu0 0
  %332 = vmatprep.subr.bf16.mxu0 0
  %333 = vmatpush1.bf16.msra.mxu0 0
  %334 = vmatprep.subr.bf16.mxu0 0
  %335 = vmatpush1.bf16.msra.mxu0 0
  %336 = vmatprep.subr.bf16.mxu0 0
  %337 = vmatpush1.bf16.msra.mxu0 0
  %338 = vmatprep.subr.bf16.mxu0 0
  %339 = vmatpush1.bf16.msra.mxu0 0
  %340 = vmatprep.subr.bf16.mxu0 0
  %341 = vmatpush1.bf16.msra.mxu0 0
  %342 = vmatprep.subr.bf16.mxu0 0
  %343 = vmatpush1.bf16.msra.mxu0 0
  %344 = vmatprep.subr.bf16.mxu0 0
  %345 = vmatpush1.bf16.msra.mxu0 0
  %346 = vmatprep.mubr.bf16.mxu0 0
  %347 = vmatmul.mubr.bf16.gmra.mrb[0].mxu0 %v242
  %v348 = vpop.f32.mrb[0].mxu0
  %v349 = vadd.f32 %v264, %v348
  %v350 = vpop.f32.mrb[0].mxu0
  %v351 = vpop.f32.mrb[0].mxu0
  %v352 = vadd.f32 %v264, %v351
  %v353 = vpop.f32.mrb[0].mxu0
  %354 = vdwg.mxu0
  %v355 = vmul.f32 %v349, 0.5
  %v356 = vmul.f32 %v352, 0.5
  %v357 = vmul.f32 %v355, 1.442695
  %v358 = vpow.pop %v357
  %v359 = vmul.f32 %v356, 1.442695
  %v360 = vpow.pop %v359
  %v361 = vld [vmem:[%s7] sm:$0xf]
  %v362 = vld [vmem:[%s7 + $0x4] sm:$0xf]
  %v363 = vunpack.c.l.bf16 %v361
  %v364 = vunpack.c.l.bf16 %v362
  %367 = vrot.lane.b32.xlu0 %v363, 16
  %v368 = vpop.permute.xlu0 %367
  %369 = vrot.lane.b32.xlu0 %v364, 16
  %v370 = vpop.permute.xlu0 %369
  %v373 = vmul.f32 %v358, %v368
  %v374 = vmul.f32 %v360, %v370
  %377 = vrot.lane.b32.xlu0 %v373, 112
  %v378 = vpop.permute.xlu0 %377
  %379 = vrot.lane.b32.xlu0 %v374, 112
  %v380 = vpop.permute.xlu0 %379
  %v383 = vadd.f32 %v349, %v378
  %v384 = vadd.f32 %v352, %v380
  %v385 = vpack.c.bf16 %v384, %v383
  %v386 = vld [vmem:[%s8] sm:$0xf]
  %v387 = vld [vmem:[%s8 + $0x4] sm:$0xf]
  %v388 = vld [vmem:[%s9] sm:$0x1]
  %v390 = vlaneseq
  %v391 = vshrl.u32 %v390, 7
  %v392 = vsub.s32 0, %v391
  %v393 = vrot.slane %v388, %v392
  %v397 = vunpack.c.l.b16 %v386
  %v398 = vunpack.c.l.b16 %v387
  %v399 = vpack.c.b16 %v398, %v397
  %vm401 = vcmask 130048
  %v403 = vsel %vm401, %v385, 0
  %405 = vmatprep.subr.bf16.mxu0 0
  %406 = vmatpush1.bf16.msra.mxu0 %v399
  %407 = vmatprep.subr.bf16.mxu0 0
  %408 = vmatpush1.bf16.msra.mxu0 0
  %409 = vmatprep.subr.bf16.mxu0 0
  %410 = vmatpush1.bf16.msra.mxu0 0
  %411 = vmatprep.subr.bf16.mxu0 0
  %412 = vmatpush1.bf16.msra.mxu0 0
  %413 = vmatprep.subr.bf16.mxu0 0
  %414 = vmatpush1.bf16.msra.mxu0 0
  %415 = vmatprep.subr.bf16.mxu0 0
  %416 = vmatpush1.bf16.msra.mxu0 0
  %417 = vmatprep.subr.bf16.mxu0 0
  %418 = vmatpush1.bf16.msra.mxu0 0
  %419 = vmatprep.subr.bf16.mxu0 0
  %420 = vmatpush1.bf16.msra.mxu0 0
  %421 = vmatprep.subr.bf16.mxu0 0
  %422 = vmatpush1.bf16.msra.mxu0 0
  %423 = vmatprep.subr.bf16.mxu0 0
  %424 = vmatpush1.bf16.msra.mxu0 0
  %425 = vmatprep.subr.bf16.mxu0 0
  %426 = vmatpush1.bf16.msra.mxu0 0
  %427 = vmatprep.subr.bf16.mxu0 0
  %428 = vmatpush1.bf16.msra.mxu0 0
  %429 = vmatprep.subr.bf16.mxu0 0
  %430 = vmatpush1.bf16.msra.mxu0 0
  %431 = vmatprep.subr.bf16.mxu0 0
  %432 = vmatpush1.bf16.msra.mxu0 0
  %433 = vmatprep.subr.bf16.mxu0 0
  %434 = vmatpush1.bf16.msra.mxu0 0
  %435 = vmatprep.subr.bf16.mxu0 0
  %436 = vmatpush1.bf16.msra.mxu0 0
  %437 = vmatprep.mubr.bf16.mxu0 0
  %438 = vmatmul.mubr.bf16.gmra.mrb[0].mxu0 %v403
  %v439 = vpop.f32.mrb[0].mxu0
  %v440 = vadd.f32 %v393, %v439
  %v441 = vpop.f32.mrb[0].mxu0
  %v442 = vpop.f32.mrb[0].mxu0
  %v443 = vadd.f32 %v393, %v442
  %v444 = vpop.f32.mrb[0].mxu0
  %445 = vdwg.mxu0
  %v446 = vmax.f32 %v440, 0.0
  %v447 = vmax.f32 %v443, 0.0
  %v448 = vpack.c.bf16 %v447, %v446
  %v449 = vld [vmem:[%s10] sm:$0xf]
  %v450 = vld [vmem:[%s10 + $0x4] sm:$0xf]
  %v451 = vld [vmem:[%s10 + $0x8] sm:$0xf]
  %v452 = vld [vmem:[%s10 + $0xc] sm:$0xf]
  %v453 = vld [vmem:[%s10 + $0x10] sm:$0xf]
  %v454 = vld [vmem:[%s10 + $0x14] sm:$0xf]
  %v455 = vld [vmem:[%s10 + $0x18] sm:$0xf]
  %v456 = vld [vmem:[%s10 + $0x1c] sm:$0xf]
  %v457 = vld [vmem:[%s10 + $0x20] sm:$0xf]
  %v458 = vld [vmem:[%s10 + $0x24] sm:$0xf]
  %v459 = vld [vmem:[%s10 + $0x28] sm:$0xf]
  %v460 = vld [vmem:[%s10 + $0x2c] sm:$0xf]
  %v461 = vld [vmem:[%s10 + $0x30] sm:$0xf]
  %v462 = vld [vmem:[%s10 + $0x34] sm:$0xf]
  %v463 = vld [vmem:[%s10 + $0x38] sm:$0xf]
  %v464 = vld [vmem:[%s10 + $0x3c] sm:$0xf]
  %v465 = vld [vmem:[%s11] sm:$0x1]
  %v467 = vlaneseq
  %v468 = vshrl.u32 %v467, 7
  %v469 = vsub.s32 0, %v468
  %v470 = vrot.slane %v465, %v469
  %v488 = vunpack.c.l.b16 %v449
  %v489 = vunpack.c.l.b16 %v450
  %v490 = vunpack.c.l.b16 %v451
  %v491 = vunpack.c.l.b16 %v452
  %v492 = vunpack.c.l.b16 %v453
  %v493 = vunpack.c.l.b16 %v454
  %v494 = vunpack.c.l.b16 %v455
  %v495 = vunpack.c.l.b16 %v456
  %v496 = vunpack.c.l.b16 %v457
  %v497 = vunpack.c.l.b16 %v458
  %v498 = vunpack.c.l.b16 %v459
  %v499 = vunpack.c.l.b16 %v460
  %v500 = vunpack.c.l.b16 %v461
  %v501 = vunpack.c.l.b16 %v462
  %v502 = vunpack.c.l.b16 %v463
  %v503 = vunpack.c.l.b16 %v464
  %v504 = vpack.c.b16 %v489, %v488
  %v505 = vpack.c.b16 %v491, %v490
  %v506 = vpack.c.b16 %v493, %v492
  %v507 = vpack.c.b16 %v495, %v494
  %v508 = vpack.c.b16 %v497, %v496
  %v509 = vpack.c.b16 %v499, %v498
  %v510 = vpack.c.b16 %v501, %v500
  %v511 = vpack.c.b16 %v503, %v502
  %520 = vmatprep.subr.bf16.mxu0 0
  %521 = vmatpush1.bf16.msra.mxu0 %v504
  %522 = vmatprep.subr.bf16.mxu0 0
  %523 = vmatpush1.bf16.msra.mxu0 %v505
  %524 = vmatprep.subr.bf16.mxu0 0
  %525 = vmatpush1.bf16.msra.mxu0 %v506
  %526 = vmatprep.subr.bf16.mxu0 0
  %527 = vmatpush1.bf16.msra.mxu0 %v507
  %528 = vmatprep.subr.bf16.mxu0 0
  %529 = vmatpush1.bf16.msra.mxu0 %v508
  %530 = vmatprep.subr.bf16.mxu0 0
  %531 = vmatpush1.bf16.msra.mxu0 %v509
  %532 = vmatprep.subr.bf16.mxu0 0
  %533 = vmatpush1.bf16.msra.mxu0 %v510
  %534 = vmatprep.subr.bf16.mxu0 0
  %535 = vmatpush1.bf16.msra.mxu0 %v511
  %536 = vmatprep.subr.bf16.mxu0 0
  %537 = vmatpush1.bf16.msra.mxu0 0
  %538 = vmatprep.subr.bf16.mxu0 0
  %539 = vmatpush1.bf16.msra.mxu0 0
  %540 = vmatprep.subr.bf16.mxu0 0
  %541 = vmatpush1.bf16.msra.mxu0 0
  %542 = vmatprep.subr.bf16.mxu0 0
  %543 = vmatpush1.bf16.msra.mxu0 0
  %544 = vmatprep.subr.bf16.mxu0 0
  %545 = vmatpush1.bf16.msra.mxu0 0
  %546 = vmatprep.subr.bf16.mxu0 0
  %547 = vmatpush1.bf16.msra.mxu0 0
  %548 = vmatprep.subr.bf16.mxu0 0
  %549 = vmatpush1.bf16.msra.mxu0 0
  %550 = vmatprep.subr.bf16.mxu0 0
  %551 = vmatpush1.bf16.msra.mxu0 0
  %552 = vmatprep.mubr.bf16.mxu0 0
  %553 = vmatmul.mubr.bf16.gmra.mrb[0].mxu0 %v448
  %v554 = vpop.f32.mrb[0].mxu0
  %v555 = vadd.f32 %v470, %v554
  %v556 = vpop.f32.mrb[0].mxu0
  %v557 = vpop.f32.mrb[0].mxu0
  %v558 = vadd.f32 %v470, %v557
  %v559 = vpop.f32.mrb[0].mxu0
  %560 = vdwg.mxu0
  %v561 = vmax.f32 %v555, 0.0
  %v562 = vmax.f32 %v558, 0.0
  %v563 = vpack.c.bf16 %v562, %v561
  %v564 = vld [vmem:[%s12] sm:$0xf]
  %v565 = vld [vmem:[%s12 + $0x4] sm:$0xf]
  %v566 = vld [vmem:[%s12 + $0x8] sm:$0xf]
  %v567 = vld [vmem:[%s12 + $0xc] sm:$0xf]
  %v568 = vld [vmem:[%s12 + $0x10] sm:$0xf]
  %v569 = vld [vmem:[%s12 + $0x14] sm:$0xf]
  %v570 = vld [vmem:[%s12 + $0x18] sm:$0xf]
  %v571 = vld [vmem:[%s12 + $0x1c] sm:$0xf]
  %v572 = vld [vmem:[%s12 + $0x20] sm:$0xf]
  %v573 = vld [vmem:[%s12 + $0x24] sm:$0xf]
  %v574 = vld [vmem:[%s12 + $0x28] sm:$0xf]
  %v575 = vld [vmem:[%s12 + $0x2c] sm:$0xf]
  %v576 = vld [vmem:[%s12 + $0x30] sm:$0xf]
  %v577 = vld [vmem:[%s12 + $0x34] sm:$0xf]
  %v578 = vld [vmem:[%s12 + $0x38] sm:$0xf]
  %v579 = vld [vmem:[%s12 + $0x3c] sm:$0xf]
  %v580 = vld [vmem:[%s13] sm:$0x1]
  %v582 = vlaneseq
  %v583 = vshrl.u32 %v582, 7
  %v584 = vsub.s32 0, %v583
  %v585 = vrot.slane %v580, %v584
  %v603 = vunpack.c.l.b16 %v564
  %v604 = vunpack.c.l.b16 %v565
  %v605 = vunpack.c.l.b16 %v566
  %v606 = vunpack.c.l.b16 %v567
  %v607 = vunpack.c.l.b16 %v568
  %v608 = vunpack.c.l.b16 %v569
  %v609 = vunpack.c.l.b16 %v570
  %v610 = vunpack.c.l.b16 %v571
  %v611 = vunpack.c.l.b16 %v572
  %v612 = vunpack.c.l.b16 %v573
  %v613 = vunpack.c.l.b16 %v574
  %v614 = vunpack.c.l.b16 %v575
  %v615 = vunpack.c.l.b16 %v576
  %v616 = vunpack.c.l.b16 %v577
  %v617 = vunpack.c.l.b16 %v578
  %v618 = vunpack.c.l.b16 %v579
  %v619 = vpack.c.b16 %v604, %v603
  %v620 = vpack.c.b16 %v606, %v605
  %v621 = vpack.c.b16 %v608, %v607
  %v622 = vpack.c.b16 %v610, %v609
  %v623 = vpack.c.b16 %v612, %v611
  %v624 = vpack.c.b16 %v614, %v613
  %v625 = vpack.c.b16 %v616, %v615
  %v626 = vpack.c.b16 %v618, %v617
  %635 = vmatprep.subr.bf16.mxu0 0
  %636 = vmatpush1.bf16.msra.mxu0 %v619
  %637 = vmatprep.subr.bf16.mxu0 0
  %638 = vmatpush1.bf16.msra.mxu0 %v620
  %639 = vmatprep.subr.bf16.mxu0 0
  %640 = vmatpush1.bf16.msra.mxu0 %v621
  %641 = vmatprep.subr.bf16.mxu0 0
  %642 = vmatpush1.bf16.msra.mxu0 %v622
  %643 = vmatprep.subr.bf16.mxu0 0
  %644 = vmatpush1.bf16.msra.mxu0 %v623
  %645 = vmatprep.subr.bf16.mxu0 0
  %646 = vmatpush1.bf16.msra.mxu0 %v624
  %647 = vmatprep.subr.bf16.mxu0 0
  %648 = vmatpush1.bf16.msra.mxu0 %v625
  %649 = vmatprep.subr.bf16.mxu0 0
  %650 = vmatpush1.bf16.msra.mxu0 %v626
  %651 = vmatprep.subr.bf16.mxu0 0
  %652 = vmatpush1.bf16.msra.mxu0 0
  %653 = vmatprep.subr.bf16.mxu0 0
  %654 = vmatpush1.bf16.msra.mxu0 0
  %655 = vmatprep.subr.bf16.mxu0 0
  %656 = vmatpush1.bf16.msra.mxu0 0
  %657 = vmatprep.subr.bf16.mxu0 0
  %658 = vmatpush1.bf16.msra.mxu0 0
  %659 = vmatprep.subr.bf16.mxu0 0
  %660 = vmatpush1.bf16.msra.mxu0 0
  %661 = vmatprep.subr.bf16.mxu0 0
  %662 = vmatpush1.bf16.msra.mxu0 0
  %663 = vmatprep.subr.bf16.mxu0 0
  %664 = vmatpush1.bf16.msra.mxu0 0
  %665 = vmatprep.subr.bf16.mxu0 0
  %666 = vmatpush1.bf16.msra.mxu0 0
  %667 = vmatprep.mubr.bf16.mxu0 0
  %668 = vmatmul.mubr.bf16.gmra.mrb[0].mxu0 %v563
  %v669 = vpop.f32.mrb[0].mxu0
  %v670 = vadd.f32 %v585, %v669
  %v671 = vpop.f32.mrb[0].mxu0
  %v672 = vpop.f32.mrb[0].mxu0
  %v673 = vadd.f32 %v585, %v672
  %v674 = vpop.f32.mrb[0].mxu0
  %675 = vdwg.mxu0
  %676 = vst.msk [vmem:[%s14] sm:$0xff] %vm80, %v670
  %677 = vst.msk [vmem:[%s14 + $0x8] sm:$0xff] %vm80, %v673
  %678 = vst.msk [vmem:[%s15] sm:$0xff] %vm80, %v349
  %679 = vst.msk [vmem:[%s15 + $0x8] sm:$0xff] %vm80, %v352
  // Predicated region
  $region58: #{vae_forward_pallas.1} parent=0 // pred_check
    _
  $region59: #{vae_forward_pallas.1} parent=0 // pred_check_branch
    %681 = sbr.rel (0) target = $region61
  $region60: #{vae_forward_pallas.1} parent=0 // pred_region
    _
  $region61: #{vae_forward_pallas.1} parent=0 // pred_fallthru
    _
  // Predicated region
  $region62: #{vae_forward_pallas.1} parent=0 // pred_check
    _
  $region63: #{vae_forward_pallas.1} parent=0 // pred_check_branch
    %683 = sbr.rel (0) target = $region65
  $region64: #{vae_forward_pallas.1} parent=0 // pred_region
    _
  $region65: #{vae_forward_pallas.1} parent=0 // pred_fallthru
    _
  // Predicated region
  $region66: #{vae_forward_pallas.1} parent=0 // pred_check
    _
  $region67: #{vae_forward_pallas.1} parent=0 // pred_check_branch
    %685 = sbr.rel (0) target = $region69
  $region68: #{vae_forward_pallas.1} parent=0 // pred_region
    _
  $region69: #{vae_forward_pallas.1} parent=0 // pred_fallthru
    _
  // Predicated region
  $region70: #{vae_forward_pallas.1} parent=0 // pred_check
    _
  $region71: #{vae_forward_pallas.1} parent=0 // pred_check_branch
    %687 = sbr.rel (0) target = $region73
  $region72: #{vae_forward_pallas.1} parent=0 // pred_region
    _
  $region73: #{vae_forward_pallas.1} parent=0 // pred_fallthru
    _

// kernel: vae_forward_pallas.1
$region0: #{vae_forward_pallas.1}
  #allocation0 [shape = 'u32[]', space=smem, size = 0x4, offset = 0x4, fixed_abs, tag = 'smem constant byte address 0x4 - core index']
  #allocation1 [shape = 'u32[144,128]{1,0:T(1,128)}', space=vmem, size = 0x12000, scoped, tag = 'internal scratch']
  %s0 = inlined_call_operand.vmem [shape: bf16[16,32], index: 0, kind: input, shape index: {}]
  %s1 = inlined_call_operand.vmem [shape: bf16[32,128], index: 1, kind: input, shape index: {}]
  %s2 = inlined_call_operand.vmem [shape: f32[1,128], index: 2, kind: input, shape index: {}]
  %s3 = inlined_call_operand.vmem [shape: bf16[128,128], index: 3, kind: input, shape index: {}]
  %s4 = inlined_call_operand.vmem [shape: f32[1,128], index: 4, kind: input, shape index: {}]
  %s5 = inlined_call_operand.vmem [shape: bf16[128,32], index: 5, kind: input, shape index: {}]
  %s6 = inlined_call_operand.vmem [shape: f32[1,32], index: 6, kind: input, shape index: {}]
  %s7 = inlined_call_operand.vmem [shape: bf16[16,16], index: 7, kind: input, shape index: {}]
  %s8 = inlined_call_operand.vmem [shape: bf16[16,128], index: 8, kind: input, shape index: {}]
  %s9 = inlined_call_operand.vmem [shape: f32[1,128], index: 9, kind: input, shape index: {}]
  %s10 = inlined_call_operand.vmem [shape: bf16[128,128], index: 10, kind: input, shape index: {}]
  %s11 = inlined_call_operand.vmem [shape: f32[1,128], index: 11, kind: input, shape index: {}]
  %s12 = inlined_call_operand.vmem [shape: bf16[128,32], index: 12, kind: input, shape index: {}]
  %s13 = inlined_call_operand.vmem [shape: f32[1,32], index: 13, kind: input, shape index: {}]
  %s14 = inlined_call_operand.vmem [shape: f32[16,32], index: 14, kind: output, shape index: {0}]
  %s15 = inlined_call_operand.vmem [shape: f32[16,32], index: 15, kind: output, shape index: {1}]
  %16 = xla_tuple %s14, %s15
  %s17 = sld [smem:[#allocation0]]
  $region74: #{vae_forward_pallas.1} parent=0
    _
  %s19 = ssub.s32 1, %s17
  %s20 = scalar_select 0, %s19, %s17
  // Predicated region
  $region2: #{vae_forward_pallas.1} parent=0 // pred_check
    _
  $region3: #{vae_forward_pallas.1} parent=0 // pred_check_branch
    %22 = sbr.rel (0) target = $region5
  $region4: #{vae_forward_pallas.1} parent=0 // pred_region
    _
  $region5: #{vae_forward_pallas.1} parent=0 // pred_fallthru
    _
  // Predicated region
  $region6: #{vae_forward_pallas.1} parent=0 // pred_check
    _
  $region7: #{vae_forward_pallas.1} parent=0 // pred_check_branch
    %24 = sbr.rel (0) target = $region9
  $region8: #{vae_forward_pallas.1} parent=0 // pred_region
    _
  $region9: #{vae_forward_pallas.1} parent=0 // pred_fallthru
    _
  // Predicated region
  $region10: #{vae_forward_pallas.1} parent=0 // pred_check
    _
  $region11: #{vae_forward_pallas.1} parent=0 // pred_check_branch
    %26 = sbr.rel (0) target = $region13
  $region12: #{vae_forward_pallas.1} parent=0 // pred_region
    _
  $region13: #{vae_forward_pallas.1} parent=0 // pred_fallthru
    _
  // Predicated region
  $region14: #{vae_forward_pallas.1} parent=0 // pred_check
    _
  $region15: #{vae_forward_pallas.1} parent=0 // pred_check_branch
    %28 = sbr.rel (0) target = $region17
  $region16: #{vae_forward_pallas.1} parent=0 // pred_region
    _
  $region17: #{vae_forward_pallas.1} parent=0 // pred_fallthru
    _
  // Predicated region
  $region18: #{vae_forward_pallas.1} parent=0 // pred_check
    _
  $region19: #{vae_forward_pallas.1} parent=0 // pred_check_branch
    %30 = sbr.rel (0) target = $region21
  $region20: #{vae_forward_pallas.1} parent=0 // pred_region
    _
  $region21: #{vae_forward_pallas.1} parent=0 // pred_fallthru
    _
  // Predicated region
  $region22: #{vae_forward_pallas.1} parent=0 // pred_check
    _
  $region23: #{vae_forward_pallas.1} parent=0 // pred_check_branch
    %32 = sbr.rel (0) target = $region25
  $region24: #{vae_forward_pallas.1} parent=0 // pred_region
    _
  $region25: #{vae_forward_pallas.1} parent=0 // pred_fallthru
    _
  // Predicated region
  $region26: #{vae_forward_pallas.1} parent=0 // pred_check
    _
  $region27: #{vae_forward_pallas.1} parent=0 // pred_check_branch
    %34 = sbr.rel (0) target = $region29
  $region28: #{vae_forward_pallas.1} parent=0 // pred_region
    _
  $region29: #{vae_forward_pallas.1} parent=0 // pred_fallthru
    _
  // Predicated region
  $region30: #{vae_forward_pallas.1} parent=0 // pred_check
    _
  $region31: #{vae_forward_pallas.1} parent=0 // pred_check_branch
    %36 = sbr.rel (0) target = $region33
  $region32: #{vae_forward_pallas.1} parent=0 // pred_region
    _
  $region33: #{vae_forward_pallas.1} parent=0 // pred_fallthru
    _
  // Predicated region
  $region34: #{vae_forward_pallas.1} parent=0 // pred_check
    _
  $region35: #{vae_forward_pallas.1} parent=0 // pred_check_branch
    %38 = sbr.rel (0) target = $region37
  $region36: #{vae_forward_pallas.1} parent=0 // pred_region
    _
  $region37: #{vae_forward_pallas.1} parent=0 // pred_fallthru
    _
  // Predicated region
  $region38: #{vae_forward_pallas.1} parent=0 // pred_check
    _
  $region39: #{vae_forward_pallas.1} parent=0 // pred_check_branch
    %40 = sbr.rel (0) target = $region41
  $region40: #{vae_forward_pallas.1} parent=0 // pred_region
    _
  $region41: #{vae_forward_pallas.1} parent=0 // pred_fallthru
    _
  // Predicated region
  $region42: #{vae_forward_pallas.1} parent=0 // pred_check
    _
  $region43: #{vae_forward_pallas.1} parent=0 // pred_check_branch
    %42 = sbr.rel (0) target = $region45
  $region44: #{vae_forward_pallas.1} parent=0 // pred_region
    _
  $region45: #{vae_forward_pallas.1} parent=0 // pred_fallthru
    _
  // Predicated region
  $region46: #{vae_forward_pallas.1} parent=0 // pred_check
    _
  $region47: #{vae_forward_pallas.1} parent=0 // pred_check_branch
    %44 = sbr.rel (0) target = $region49
  $region48: #{vae_forward_pallas.1} parent=0 // pred_region
    _
  $region49: #{vae_forward_pallas.1} parent=0 // pred_fallthru
    _
  // Predicated region
  $region50: #{vae_forward_pallas.1} parent=0 // pred_check
    _
  $region51: #{vae_forward_pallas.1} parent=0 // pred_check_branch
    %46 = sbr.rel (0) target = $region53
  $region52: #{vae_forward_pallas.1} parent=0 // pred_region
    _
  $region53: #{vae_forward_pallas.1} parent=0 // pred_fallthru
    _
  // Predicated region
  $region54: #{vae_forward_pallas.1} parent=0 // pred_check
    _
  $region55: #{vae_forward_pallas.1} parent=0 // pred_check_branch
    %48 = sbr.rel (0) target = $region57
  $region56: #{vae_forward_pallas.1} parent=0 // pred_region
    _
  $region57: #{vae_forward_pallas.1} parent=0 // pred_fallthru
    _
  %v50 = vld [vmem:[%s0] sm:$0xf]
  %v51 = vld [vmem:[%s0 + $0x4] sm:$0xf]
  %v52 = vld [vmem:[%s1] sm:$0xf]
  %v53 = vld [vmem:[%s1 + $0x4] sm:$0xf]
  %v54 = vld [vmem:[%s1 + $0x8] sm:$0xf]
  %v55 = vld [vmem:[%s1 + $0xc] sm:$0xf]
  %v56 = vld [vmem:[%s2] sm:$0x1]
  %v58 = vlaneseq
  %v59 = vshrl.u32 %v58, 7
  %v60 = vsub.s32 0, %v59
  %v61 = vrot.slane %v56, %v60
  %v65 = vunpack.c.l.b16 %v50
  %v66 = vunpack.c.l.b16 %v51
  %v67 = vpack.c.b16 %v66, %v65
  %v72 = vunpack.c.l.b16 %v52
  %v73 = vunpack.c.l.b16 %v53
  %v74 = vunpack.c.l.b16 %v54
  %v75 = vunpack.c.l.b16 %v55
  %v76 = vpack.c.b16 %v73, %v72
  %v77 = vpack.c.b16 %v75, %v74
  %vm80 = vcmask 261120
  %v82 = vsel %vm80, %v67, 0
  %84 = vmatprep.subr.bf16.mxu0 0
  %85 = vmatpush1.bf16.msra.mxu0 %v76
  %86 = vmatprep.subr.bf16.mxu0 0
  %87 = vmatpush1.bf16.msra.mxu0 %v77
  %88 = vmatprep.subr.bf16.mxu0 0
  %89 = vmatpush1.bf16.msra.mxu0 0
  %90 = vmatprep.subr.bf16.mxu0 0
  %91 = vmatpush1.bf16.msra.mxu0 0
  %92 = vmatprep.subr.bf16.mxu0 0
  %93 = vmatpush1.bf16.msra.mxu0 0
  %94 = vmatprep.subr.bf16.mxu0 0
  %95 = vmatpush1.bf16.msra.mxu0 0
  %96 = vmatprep.subr.bf16.mxu0 0
  %97 = vmatpush1.bf16.msra.mxu0 0
  %98 = vmatprep.subr.bf16.mxu0 0
  %99 = vmatpush1.bf16.msra.mxu0 0
  %100 = vmatprep.subr.bf16.mxu0 0
  %101 = vmatpush1.bf16.msra.mxu0 0
  %102 = vmatprep.subr.bf16.mxu0 0
  %103 = vmatpush1.bf16.msra.mxu0 0
  %104 = vmatprep.subr.bf16.mxu0 0
  %105 = vmatpush1.bf16.msra.mxu0 0
  %106 = vmatprep.subr.bf16.mxu0 0
  %107 = vmatpush1.bf16.msra.mxu0 0
  %108 = vmatprep.subr.bf16.mxu0 0
  %109 = vmatpush1.bf16.msra.mxu0 0
  %110 = vmatprep.subr.bf16.mxu0 0
  %111 = vmatpush1.bf16.msra.mxu0 0
  %112 = vmatprep.subr.bf16.mxu0 0
  %113 = vmatpush1.bf16.msra.mxu0 0
  %114 = vmatprep.subr.bf16.mxu0 0
  %115 = vmatpush1.bf16.msra.mxu0 0
  %116 = vmatprep.mubr.bf16.mxu0 0
  %117 = vmatmul.mubr.bf16.gmra.mrb[0].mxu0 %v82
  %v118 = vpop.f32.mrb[0].mxu0
  %v119 = vadd.f32 %v61, %v118
  %v120 = vpop.f32.mrb[0].mxu0
  %v121 = vpop.f32.mrb[0].mxu0
  %v122 = vadd.f32 %v61, %v121
  %v123 = vpop.f32.mrb[0].mxu0
  %124 = vdwg.mxu0
  %v125 = vmax.f32 %v119, 0.0
  %v126 = vmax.f32 %v122, 0.0
  %v127 = vpack.c.bf16 %v126, %v125
  %v128 = vld [vmem:[%s3] sm:$0xf]
  %v129 = vld [vmem:[%s3 + $0x4] sm:$0xf]
  %v130 = vld [vmem:[%s3 + $0x8] sm:$0xf]
  %v131 = vld [vmem:[%s3 + $0xc] sm:$0xf]
  %v132 = vld [vmem:[%s3 + $0x10] sm:$0xf]
  %v133 = vld [vmem:[%s3 + $0x14] sm:$0xf]
  %v134 = vld [vmem:[%s3 + $0x18] sm:$0xf]
  %v135 = vld [vmem:[%s3 + $0x1c] sm:$0xf]
  %v136 = vld [vmem:[%s3 + $0x20] sm:$0xf]
  %v137 = vld [vmem:[%s3 + $0x24] sm:$0xf]
  %v138 = vld [vmem:[%s3 + $0x28] sm:$0xf]
  %v139 = vld [vmem:[%s3 + $0x2c] sm:$0xf]
  %v140 = vld [vmem:[%s3 + $0x30] sm:$0xf]
  %v141 = vld [vmem:[%s3 + $0x34] sm:$0xf]
  %v142 = vld [vmem:[%s3 + $0x38] sm:$0xf]
  %v143 = vld [vmem:[%s3 + $0x3c] sm:$0xf]
  %v144 = vld [vmem:[%s4] sm:$0x1]
  %v146 = vlaneseq
  %v147 = vshrl.u32 %v146, 7
  %v148 = vsub.s32 0, %v147
  %v149 = vrot.slane %v144, %v148
  %v167 = vunpack.c.l.b16 %v128
  %v168 = vunpack.c.l.b16 %v129
  %v169 = vunpack.c.l.b16 %v130
  %v170 = vunpack.c.l.b16 %v131
  %v171 = vunpack.c.l.b16 %v132
  %v172 = vunpack.c.l.b16 %v133
  %v173 = vunpack.c.l.b16 %v134
  %v174 = vunpack.c.l.b16 %v135
  %v175 = vunpack.c.l.b16 %v136
  %v176 = vunpack.c.l.b16 %v137
  %v177 = vunpack.c.l.b16 %v138
  %v178 = vunpack.c.l.b16 %v139
  %v179 = vunpack.c.l.b16 %v140
  %v180 = vunpack.c.l.b16 %v141
  %v181 = vunpack.c.l.b16 %v142
  %v182 = vunpack.c.l.b16 %v143
  %v183 = vpack.c.b16 %v168, %v167
  %v184 = vpack.c.b16 %v170, %v169
  %v185 = vpack.c.b16 %v172, %v171
  %v186 = vpack.c.b16 %v174, %v173
  %v187 = vpack.c.b16 %v176, %v175
  %v188 = vpack.c.b16 %v178, %v177
  %v189 = vpack.c.b16 %v180, %v179
  %v190 = vpack.c.b16 %v182, %v181
  %199 = vmatprep.subr.bf16.mxu0 0
  %200 = vmatpush1.bf16.msra.mxu0 %v183
  %201 = vmatprep.subr.bf16.mxu0 0
  %202 = vmatpush1.bf16.msra.mxu0 %v184
  %203 = vmatprep.subr.bf16.mxu0 0
  %204 = vmatpush1.bf16.msra.mxu0 %v185
  %205 = vmatprep.subr.bf16.mxu0 0
  %206 = vmatpush1.bf16.msra.mxu0 %v186
  %207 = vmatprep.subr.bf16.mxu0 0
  %208 = vmatpush1.bf16.msra.mxu0 %v187
  %209 = vmatprep.subr.bf16.mxu0 0
  %210 = vmatpush1.bf16.msra.mxu0 %v188
  %211 = vmatprep.subr.bf16.mxu0 0
  %212 = vmatpush1.bf16.msra.mxu0 %v189
  %213 = vmatprep.subr.bf16.mxu0 0
  %214 = vmatpush1.bf16.msra.mxu0 %v190
  %215 = vmatprep.subr.bf16.mxu0 0
  %216 = vmatpush1.bf16.msra.mxu0 0
  %217 = vmatprep.subr.bf16.mxu0 0
  %218 = vmatpush1.bf16.msra.mxu0 0
  %219 = vmatprep.subr.bf16.mxu0 0
  %220 = vmatpush1.bf16.msra.mxu0 0
  %221 = vmatprep.subr.bf16.mxu0 0
  %222 = vmatpush1.bf16.msra.mxu0 0
  %223 = vmatprep.subr.bf16.mxu0 0
  %224 = vmatpush1.bf16.msra.mxu0 0
  %225 = vmatprep.subr.bf16.mxu0 0
  %226 = vmatpush1.bf16.msra.mxu0 0
  %227 = vmatprep.subr.bf16.mxu0 0
  %228 = vmatpush1.bf16.msra.mxu0 0
  %229 = vmatprep.subr.bf16.mxu0 0
  %230 = vmatpush1.bf16.msra.mxu0 0
  %231 = vmatprep.mubr.bf16.mxu0 0
  %232 = vmatmul.mubr.bf16.gmra.mrb[0].mxu0 %v127
  %v233 = vpop.f32.mrb[0].mxu0
  %v234 = vadd.f32 %v149, %v233
  %v235 = vpop.f32.mrb[0].mxu0
  %v236 = vpop.f32.mrb[0].mxu0
  %v237 = vadd.f32 %v149, %v236
  %v238 = vpop.f32.mrb[0].mxu0
  %239 = vdwg.mxu0
  %v240 = vmax.f32 %v234, 0.0
  %v241 = vmax.f32 %v237, 0.0
  %v242 = vpack.c.bf16 %v241, %v240
  %v243 = vld [vmem:[%s5] sm:$0xf]
  %v244 = vld [vmem:[%s5 + $0x4] sm:$0xf]
  %v245 = vld [vmem:[%s5 + $0x8] sm:$0xf]
  %v246 = vld [vmem:[%s5 + $0xc] sm:$0xf]
  %v247 = vld [vmem:[%s5 + $0x10] sm:$0xf]
  %v248 = vld [vmem:[%s5 + $0x14] sm:$0xf]
  %v249 = vld [vmem:[%s5 + $0x18] sm:$0xf]
  %v250 = vld [vmem:[%s5 + $0x1c] sm:$0xf]
  %v251 = vld [vmem:[%s5 + $0x20] sm:$0xf]
  %v252 = vld [vmem:[%s5 + $0x24] sm:$0xf]
  %v253 = vld [vmem:[%s5 + $0x28] sm:$0xf]
  %v254 = vld [vmem:[%s5 + $0x2c] sm:$0xf]
  %v255 = vld [vmem:[%s5 + $0x30] sm:$0xf]
  %v256 = vld [vmem:[%s5 + $0x34] sm:$0xf]
  %v257 = vld [vmem:[%s5 + $0x38] sm:$0xf]
  %v258 = vld [vmem:[%s5 + $0x3c] sm:$0xf]
  %v259 = vld [vmem:[%s6] sm:$0x1]
  %v261 = vlaneseq
  %v262 = vshrl.u32 %v261, 7
  %v263 = vsub.s32 0, %v262
  %v264 = vrot.slane %v259, %v263
  %v282 = vunpack.c.l.b16 %v243
  %v283 = vunpack.c.l.b16 %v244
  %v284 = vunpack.c.l.b16 %v245
  %v285 = vunpack.c.l.b16 %v246
  %v286 = vunpack.c.l.b16 %v247
  %v287 = vunpack.c.l.b16 %v248
  %v288 = vunpack.c.l.b16 %v249
  %v289 = vunpack.c.l.b16 %v250
  %v290 = vunpack.c.l.b16 %v251
  %v291 = vunpack.c.l.b16 %v252
  %v292 = vunpack.c.l.b16 %v253
  %v293 = vunpack.c.l.b16 %v254
  %v294 = vunpack.c.l.b16 %v255
  %v295 = vunpack.c.l.b16 %v256
  %v296 = vunpack.c.l.b16 %v257
  %v297 = vunpack.c.l.b16 %v258
  %v298 = vpack.c.b16 %v283, %v282
  %v299 = vpack.c.b16 %v285, %v284
  %v300 = vpack.c.b16 %v287, %v286
  %v301 = vpack.c.b16 %v289, %v288
  %v302 = vpack.c.b16 %v291, %v290
  %v303 = vpack.c.b16 %v293, %v292
  %v304 = vpack.c.b16 %v295, %v294
  %v305 = vpack.c.b16 %v297, %v296
  %314 = vmatprep.subr.bf16.mxu0 0
  %315 = vmatpush1.bf16.msra.mxu0 %v298
  %316 = vmatprep.subr.bf16.mxu0 0
  %317 = vmatpush1.bf16.msra.mxu0 %v299
  %318 = vmatprep.subr.bf16.mxu0 0
  %319 = vmatpush1.bf16.msra.mxu0 %v300
  %320 = vmatprep.subr.bf16.mxu0 0
  %321 = vmatpush1.bf16.msra.mxu0 %v301
  %322 = vmatprep.subr.bf16.mxu0 0
  %323 = vmatpush1.bf16.msra.mxu0 %v302
  %324 = vmatprep.subr.bf16.mxu0 0
  %325 = vmatpush1.bf16.msra.mxu0 %v303
  %326 = vmatprep.subr.bf16.mxu0 0
  %327 = vmatpush1.bf16.msra.mxu0 %v304
  %328 = vmatprep.subr.bf16.mxu0 0
  %329 = vmatpush1.bf16.msra.mxu0 %v305
  %330 = vmatprep.subr.bf16.mxu0 0
  %331 = vmatpush1.bf16.msra.mxu0 0
  %332 = vmatprep.subr.bf16.mxu0 0
  %333 = vmatpush1.bf16.msra.mxu0 0
  %334 = vmatprep.subr.bf16.mxu0 0
  %335 = vmatpush1.bf16.msra.mxu0 0
  %336 = vmatprep.subr.bf16.mxu0 0
  %337 = vmatpush1.bf16.msra.mxu0 0
  %338 = vmatprep.subr.bf16.mxu0 0
  %339 = vmatpush1.bf16.msra.mxu0 0
  %340 = vmatprep.subr.bf16.mxu0 0
  %341 = vmatpush1.bf16.msra.mxu0 0
  %342 = vmatprep.subr.bf16.mxu0 0
  %343 = vmatpush1.bf16.msra.mxu0 0
  %344 = vmatprep.subr.bf16.mxu0 0
  %345 = vmatpush1.bf16.msra.mxu0 0
  %346 = vmatprep.mubr.bf16.mxu0 0
  %347 = vmatmul.mubr.bf16.gmra.mrb[0].mxu0 %v242
  %v348 = vpop.f32.mrb[0].mxu0
  %v349 = vadd.f32 %v264, %v348
  %v350 = vpop.f32.mrb[0].mxu0
  %v351 = vpop.f32.mrb[0].mxu0
  %v352 = vadd.f32 %v264, %v351
  %v353 = vpop.f32.mrb[0].mxu0
  %354 = vdwg.mxu0
  %v355 = vmul.f32 %v349, 0.5
  %v356 = vmul.f32 %v352, 0.5
  %v357 = vmul.f32 %v355, 1.442695
  %v358 = vpow.pop %v357
  %v359 = vmul.f32 %v356, 1.442695
  %v360 = vpow.pop %v359
  %v361 = vld [vmem:[%s7] sm:$0xf]
  %v362 = vld [vmem:[%s7 + $0x4] sm:$0xf]
  %v363 = vunpack.c.l.bf16 %v361
  %v364 = vunpack.c.l.bf16 %v362
  %367 = vrot.lane.b32.xlu0 %v363, 16
  %v368 = vpop.permute.xlu0 %367
  %369 = vrot.lane.b32.xlu0 %v364, 16
  %v370 = vpop.permute.xlu0 %369
  %v373 = vmul.f32 %v358, %v368
  %v374 = vmul.f32 %v360, %v370
  %377 = vrot.lane.b32.xlu0 %v373, 112
  %v378 = vpop.permute.xlu0 %377
  %379 = vrot.lane.b32.xlu0 %v374, 112
  %v380 = vpop.permute.xlu0 %379
  %v383 = vadd.f32 %v349, %v378
  %v384 = vadd.f32 %v352, %v380
  %v385 = vpack.c.bf16 %v384, %v383
  %v386 = vld [vmem:[%s8] sm:$0xf]
  %v387 = vld [vmem:[%s8 + $0x4] sm:$0xf]
  %v388 = vld [vmem:[%s9] sm:$0x1]
  %v390 = vlaneseq
  %v391 = vshrl.u32 %v390, 7
  %v392 = vsub.s32 0, %v391
  %v393 = vrot.slane %v388, %v392
  %v397 = vunpack.c.l.b16 %v386
  %v398 = vunpack.c.l.b16 %v387
  %v399 = vpack.c.b16 %v398, %v397
  %vm401 = vcmask 130048
  %v403 = vsel %vm401, %v385, 0
  %405 = vmatprep.subr.bf16.mxu0 0
  %406 = vmatpush1.bf16.msra.mxu0 %v399
  %407 = vmatprep.subr.bf16.mxu0 0
  %408 = vmatpush1.bf16.msra.mxu0 0
  %409 = vmatprep.subr.bf16.mxu0 0
  %410 = vmatpush1.bf16.msra.mxu0 0
  %411 = vmatprep.subr.bf16.mxu0 0
  %412 = vmatpush1.bf16.msra.mxu0 0
  %413 = vmatprep.subr.bf16.mxu0 0
  %414 = vmatpush1.bf16.msra.mxu0 0
  %415 = vmatprep.subr.bf16.mxu0 0
  %416 = vmatpush1.bf16.msra.mxu0 0
  %417 = vmatprep.subr.bf16.mxu0 0
  %418 = vmatpush1.bf16.msra.mxu0 0
  %419 = vmatprep.subr.bf16.mxu0 0
  %420 = vmatpush1.bf16.msra.mxu0 0
  %421 = vmatprep.subr.bf16.mxu0 0
  %422 = vmatpush1.bf16.msra.mxu0 0
  %423 = vmatprep.subr.bf16.mxu0 0
  %424 = vmatpush1.bf16.msra.mxu0 0
  %425 = vmatprep.subr.bf16.mxu0 0
  %426 = vmatpush1.bf16.msra.mxu0 0
  %427 = vmatprep.subr.bf16.mxu0 0
  %428 = vmatpush1.bf16.msra.mxu0 0
  %429 = vmatprep.subr.bf16.mxu0 0
  %430 = vmatpush1.bf16.msra.mxu0 0
  %431 = vmatprep.subr.bf16.mxu0 0
  %432 = vmatpush1.bf16.msra.mxu0 0
  %433 = vmatprep.subr.bf16.mxu0 0
  %434 = vmatpush1.bf16.msra.mxu0 0
  %435 = vmatprep.subr.bf16.mxu0 0
  %436 = vmatpush1.bf16.msra.mxu0 0
  %437 = vmatprep.mubr.bf16.mxu0 0
  %438 = vmatmul.mubr.bf16.gmra.mrb[0].mxu0 %v403
  %v439 = vpop.f32.mrb[0].mxu0
  %v440 = vadd.f32 %v393, %v439
  %v441 = vpop.f32.mrb[0].mxu0
  %v442 = vpop.f32.mrb[0].mxu0
  %v443 = vadd.f32 %v393, %v442
  %v444 = vpop.f32.mrb[0].mxu0
  %445 = vdwg.mxu0
  %v446 = vmax.f32 %v440, 0.0
  %v447 = vmax.f32 %v443, 0.0
  %v448 = vpack.c.bf16 %v447, %v446
  %v449 = vld [vmem:[%s10] sm:$0xf]
  %v450 = vld [vmem:[%s10 + $0x4] sm:$0xf]
  %v451 = vld [vmem:[%s10 + $0x8] sm:$0xf]
  %v452 = vld [vmem:[%s10 + $0xc] sm:$0xf]
  %v453 = vld [vmem:[%s10 + $0x10] sm:$0xf]
  %v454 = vld [vmem:[%s10 + $0x14] sm:$0xf]
  %v455 = vld [vmem:[%s10 + $0x18] sm:$0xf]
  %v456 = vld [vmem:[%s10 + $0x1c] sm:$0xf]
  %v457 = vld [vmem:[%s10 + $0x20] sm:$0xf]
  %v458 = vld [vmem:[%s10 + $0x24] sm:$0xf]
  %v459 = vld [vmem:[%s10 + $0x28] sm:$0xf]
  %v460 = vld [vmem:[%s10 + $0x2c] sm:$0xf]
  %v461 = vld [vmem:[%s10 + $0x30] sm:$0xf]
  %v462 = vld [vmem:[%s10 + $0x34] sm:$0xf]
  %v463 = vld [vmem:[%s10 + $0x38] sm:$0xf]
  %v464 = vld [vmem:[%s10 + $0x3c] sm:$0xf]
  %v465 = vld [vmem:[%s11] sm:$0x1]
  %v467 = vlaneseq
  %v468 = vshrl.u32 %v467, 7
  %v469 = vsub.s32 0, %v468
  %v470 = vrot.slane %v465, %v469
  %v488 = vunpack.c.l.b16 %v449
  %v489 = vunpack.c.l.b16 %v450
  %v490 = vunpack.c.l.b16 %v451
  %v491 = vunpack.c.l.b16 %v452
  %v492 = vunpack.c.l.b16 %v453
  %v493 = vunpack.c.l.b16 %v454
  %v494 = vunpack.c.l.b16 %v455
  %v495 = vunpack.c.l.b16 %v456
  %v496 = vunpack.c.l.b16 %v457
  %v497 = vunpack.c.l.b16 %v458
  %v498 = vunpack.c.l.b16 %v459
  %v499 = vunpack.c.l.b16 %v460
  %v500 = vunpack.c.l.b16 %v461
  %v501 = vunpack.c.l.b16 %v462
  %v502 = vunpack.c.l.b16 %v463
  %v503 = vunpack.c.l.b16 %v464
  %v504 = vpack.c.b16 %v489, %v488
  %v505 = vpack.c.b16 %v491, %v490
  %v506 = vpack.c.b16 %v493, %v492
  %v507 = vpack.c.b16 %v495, %v494
  %v508 = vpack.c.b16 %v497, %v496
  %v509 = vpack.c.b16 %v499, %v498
  %v510 = vpack.c.b16 %v501, %v500
  %v511 = vpack.c.b16 %v503, %v502
  %520 = vmatprep.subr.bf16.mxu0 0
  %521 = vmatpush1.bf16.msra.mxu0 %v504
  %522 = vmatprep.subr.bf16.mxu0 0
  %523 = vmatpush1.bf16.msra.mxu0 %v505
  %524 = vmatprep.subr.bf16.mxu0 0
  %525 = vmatpush1.bf16.msra.mxu0 %v506
  %526 = vmatprep.subr.bf16.mxu0 0
  %527 = vmatpush1.bf16.msra.mxu0 %v507
  %528 = vmatprep.subr.bf16.mxu0 0
  %529 = vmatpush1.bf16.msra.mxu0 %v508
  %530 = vmatprep.subr.bf16.mxu0 0
  %531 = vmatpush1.bf16.msra.mxu0 %v509
  %532 = vmatprep.subr.bf16.mxu0 0
  %533 = vmatpush1.bf16.msra.mxu0 %v510
  %534 = vmatprep.subr.bf16.mxu0 0
  %535 = vmatpush1.bf16.msra.mxu0 %v511
  %536 = vmatprep.subr.bf16.mxu0 0
  %537 = vmatpush1.bf16.msra.mxu0 0
  %538 = vmatprep.subr.bf16.mxu0 0
  %539 = vmatpush1.bf16.msra.mxu0 0
  %540 = vmatprep.subr.bf16.mxu0 0
  %541 = vmatpush1.bf16.msra.mxu0 0
  %542 = vmatprep.subr.bf16.mxu0 0
  %543 = vmatpush1.bf16.msra.mxu0 0
  %544 = vmatprep.subr.bf16.mxu0 0
  %545 = vmatpush1.bf16.msra.mxu0 0
  %546 = vmatprep.subr.bf16.mxu0 0
  %547 = vmatpush1.bf16.msra.mxu0 0
  %548 = vmatprep.subr.bf16.mxu0 0
  %549 = vmatpush1.bf16.msra.mxu0 0
  %550 = vmatprep.subr.bf16.mxu0 0
  %551 = vmatpush1.bf16.msra.mxu0 0
  %552 = vmatprep.mubr.bf16.mxu0 0
  %553 = vmatmul.mubr.bf16.gmra.mrb[0].mxu0 %v448
  %v554 = vpop.f32.mrb[0].mxu0
  %v555 = vadd.f32 %v470, %v554
  %v556 = vpop.f32.mrb[0].mxu0
  %v557 = vpop.f32.mrb[0].mxu0
  %v558 = vadd.f32 %v470, %v557
  %v559 = vpop.f32.mrb[0].mxu0
  %560 = vdwg.mxu0
  %v561 = vmax.f32 %v555, 0.0
  %v562 = vmax.f32 %v558, 0.0
  %v563 = vpack.c.bf16 %v562, %v561
  %v564 = vld [vmem:[%s12] sm:$0xf]
  %v565 = vld [vmem:[%s12 + $0x4] sm:$0xf]
  %v566 = vld [vmem:[%s12 + $0x8] sm:$0xf]
  %v567 = vld [vmem:[%s12 + $0xc] sm:$0xf]
  %v568 = vld [vmem:[%s12 + $0x10] sm:$0xf]
  %v569 = vld [vmem:[%s12 + $0x14] sm:$0xf]
  %v570 = vld [vmem:[%s12 + $0x18] sm:$0xf]
  %v571 = vld [vmem:[%s12 + $0x1c] sm:$0xf]
  %v572 = vld [vmem:[%s12 + $0x20] sm:$0xf]
  %v573 = vld [vmem:[%s12 + $0x24] sm:$0xf]
  %v574 = vld [vmem:[%s12 + $0x28] sm:$0xf]
  %v575 = vld [vmem:[%s12 + $0x2c] sm:$0xf]
  %v576 = vld [vmem:[%s12 + $0x30] sm:$0xf]
  %v577 = vld [vmem:[%s12 + $0x34] sm:$0xf]
  %v578 = vld [vmem:[%s12 + $0x38] sm:$0xf]
  %v579 = vld [vmem:[%s12 + $0x3c] sm:$0xf]
  %v580 = vld [vmem:[%s13] sm:$0x1]
  %v582 = vlaneseq
  %v583 = vshrl.u32 %v582, 7
  %v584 = vsub.s32 0, %v583
  %v585 = vrot.slane %v580, %v584
  %v603 = vunpack.c.l.b16 %v564
  %v604 = vunpack.c.l.b16 %v565
  %v605 = vunpack.c.l.b16 %v566
  %v606 = vunpack.c.l.b16 %v567
  %v607 = vunpack.c.l.b16 %v568
  %v608 = vunpack.c.l.b16 %v569
  %v609 = vunpack.c.l.b16 %v570
  %v610 = vunpack.c.l.b16 %v571
  %v611 = vunpack.c.l.b16 %v572
  %v612 = vunpack.c.l.b16 %v573
  %v613 = vunpack.c.l.b16 %v574
  %v614 = vunpack.c.l.b16 %v575
  %v615 = vunpack.c.l.b16 %v576
  %v616 = vunpack.c.l.b16 %v577
  %v617 = vunpack.c.l.b16 %v578
  %v618 = vunpack.c.l.b16 %v579
  %v619 = vpack.c.b16 %v604, %v603
  %v620 = vpack.c.b16 %v606, %v605
  %v621 = vpack.c.b16 %v608, %v607
  %v622 = vpack.c.b16 %v610, %v609
  %v623 = vpack.c.b16 %v612, %v611
  %v624 = vpack.c.b16 %v614, %v613
  %v625 = vpack.c.b16 %v616, %v615
  %v626 = vpack.c.b16 %v618, %v617
  %635 = vmatprep.subr.bf16.mxu0 0
  %636 = vmatpush1.bf16.msra.mxu0 %v619
  %637 = vmatprep.subr.bf16.mxu0 0
  %638 = vmatpush1.bf16.msra.mxu0 %v620
  %639 = vmatprep.subr.bf16.mxu0 0
  %640 = vmatpush1.bf16.msra.mxu0 %v621
  %641 = vmatprep.subr.bf16.mxu0 0
  %642 = vmatpush1.bf16.msra.mxu0 %v622
  %643 = vmatprep.subr.bf16.mxu0 0
  %644 = vmatpush1.bf16.msra.mxu0 %v623
  %645 = vmatprep.subr.bf16.mxu0 0
  %646 = vmatpush1.bf16.msra.mxu0 %v624
  %647 = vmatprep.subr.bf16.mxu0 0
  %648 = vmatpush1.bf16.msra.mxu0 %v625
  %649 = vmatprep.subr.bf16.mxu0 0
  %650 = vmatpush1.bf16.msra.mxu0 %v626
  %651 = vmatprep.subr.bf16.mxu0 0
  %652 = vmatpush1.bf16.msra.mxu0 0
  %653 = vmatprep.subr.bf16.mxu0 0
  %654 = vmatpush1.bf16.msra.mxu0 0
  %655 = vmatprep.subr.bf16.mxu0 0
  %656 = vmatpush1.bf16.msra.mxu0 0
  %657 = vmatprep.subr.bf16.mxu0 0
  %658 = vmatpush1.bf16.msra.mxu0 0
  %659 = vmatprep.subr.bf16.mxu0 0
  %660 = vmatpush1.bf16.msra.mxu0 0
  %661 = vmatprep.subr.bf16.mxu0 0
  %662 = vmatpush1.bf16.msra.mxu0 0
  %663 = vmatprep.subr.bf16.mxu0 0
  %664 = vmatpush1.bf16.msra.mxu0 0
  %665 = vmatprep.subr.bf16.mxu0 0
  %666 = vmatpush1.bf16.msra.mxu0 0
  %667 = vmatprep.mubr.bf16.mxu0 0
  %668 = vmatmul.mubr.bf16.gmra.mrb[0].mxu0 %v563
  %v669 = vpop.f32.mrb[0].mxu0
  %v670 = vadd.f32 %v585, %v669
  %v671 = vpop.f32.mrb[0].mxu0
  %v672 = vpop.f32.mrb[0].mxu0
  %v673 = vadd.f32 %v585, %v672
  %v674 = vpop.f32.mrb[0].mxu0
  %675 = vdwg.mxu0
  %676 = vst.msk [vmem:[%s14] sm:$0xff] %vm80, %v670
  %677 = vst.msk [vmem:[%s14 + $0x8] sm:$0xff] %vm80, %v673
  %678 = vst.msk [vmem:[%s15] sm:$0xff] %vm80, %v349
  %679 = vst.msk [vmem:[%s15 + $0x8] sm:$0xff] %vm80, %v352
  // Predicated region
  $region58: #{vae_forward_pallas.1} parent=0 // pred_check
    _
  $region59: #{vae_forward_pallas.1} parent=0 // pred_check_branch
    %681 = sbr.rel (0) target = $region61
  $region60: #{vae_forward_pallas.1} parent=0 // pred_region
    _
  $region61: #{vae_forward_pallas.1} parent=0 // pred_fallthru
    _
  // Predicated region
  $region62: #{vae_forward_pallas.1} parent=0 // pred_check
    _
  $region63: #{vae_forward_pallas.1} parent=0 // pred_check_branch
    %683 = sbr.rel (0) target = $region65
  $region64: #{vae_forward_pallas.1} parent=0 // pred_region
    _
  $region65: #{vae_forward_pallas.1} parent=0 // pred_fallthru
    _
  // Predicated region
  $region66: #{vae_forward_pallas.1} parent=0 // pred_check
    _
  $region67: #{vae_forward_pallas.1} parent=0 // pred_check_branch
    %685 = sbr.rel (0) target = $region69
  $region68: #{vae_forward_pallas.1} parent=0 // pred_region
    _
  $region69: #{vae_forward_pallas.1} parent=0 // pred_fallthru
    _
  // Predicated region
  $region70: #{vae_forward_pallas.1} parent=0 // pred_check
    _
  $region71: #{vae_forward_pallas.1} parent=0 // pred_check_branch
    %687 = sbr.rel (0) target = $region73
  $region72: #{vae_forward_pallas.1} parent=0 // pred_region
    _
  $region73: #{vae_forward_pallas.1} parent=0 // pred_fallthru
    _

</llo_original>
